<compile_context>
chip_gen: v7x
topology: tpu7x:2x2x1
jax: 0.10.0
libtpu: 0.0.40
codegen_flags: <defaults>
</compile_context>

<pallas_src>
import functools
import math

import jax
import jax.numpy as jnp
from jax.experimental import pallas as pl
from jax.experimental.pallas import tpu as pltpu  # noqa: F401 (no scratch needed at this size)

# ------------------------- synthetic BERT config ----------------------------
VOCAB = 100
VOCAB_PAD = ((VOCAB + 7) // 8) * 8          # 104, sublane-aligned
MAX_POS = 16
HIDDEN = 32
N_HEADS = 2
HEAD_DIM = HIDDEN // N_HEADS
INTERMEDIATE = 64
N_LAYERS = 2
N_CLASSES = 3
LN_EPS = 1e-12
LANE = 128                                   # lane-padded classifier width
SLAB_W = 4 * HIDDEN + 2 * INTERMEDIATE       # 256: [Wq|Wk|Wv|Wo|W1|W2^T]
assert SLAB_W >= HIDDEN + LANE               # pooler/classifier slab fits too


# ------------------------------ fused kernel --------------------------------
def _bert_fused_kernel(ids_ref, mask_ref, emb_ref, w_ref, vec_ref, out_ref, *,
                       batch, seq):
    bs = batch * seq
    H, D, I = HIDDEN, HEAD_DIM, INTERMEDIATE
    bf16, f32 = jnp.bfloat16, jnp.float32
    scale = 1.0 / math.sqrt(D)

    def layernorm(x, g, b):
        mean = jnp.mean(x, axis=-1, keepdims=True)
        xc = x - mean
        var = jnp.mean(xc * xc, axis=-1, keepdims=True)
        return xc * jax.lax.rsqrt(var + LN_EPS) * g + b

    def gelu(y):
        # TODO(synk): HF BertModel uses exact erf GELU; tanh approximation
        # used here (erf lowering is not guaranteed on Mosaic).
        return 0.5 * y * (1.0 + jnp.tanh(0.7978845608028654 *
                                         (y + 0.044715 * y * y * y)))

    V = vec_ref[...]                          # (3*L+2, 128) f32 -- one vreg
    r = 3 * N_LAYERS                          # row with emb-LN / pooler bias

    # ---- embedding: one-hot gather against the VMEM-resident table ----
    tbl = emb_ref[...]                        # (VOCAB_PAD + MAX_POS, H) bf16
    ids = ids_ref[...]                        # (bs, 1) int32
    onehot = (ids == jax.lax.broadcasted_iota(
        jnp.int32, (bs, VOCAB_PAD + MAX_POS), 1)).astype(bf16)
    word = jnp.dot(onehot, tbl, preferred_element_type=f32)        # (bs, H)
    pos = tbl[VOCAB_PAD:VOCAB_PAD + seq, :].astype(f32)            # (seq, H)
    x = word + jnp.concatenate([pos] * batch, axis=0)
    x = layernorm(x, V[r:r + 1, 0:H], V[r:r + 1, H:2 * H])

    # ---- attention bias: layer/head invariant, computed ONCE ----
    # Attention runs per head over the full [bs, bs] block, so the bias is
    # block-diagonal over batch combined with the key-padding mask.
    keym = mask_ref[...] > 0.5                                     # (1, bs)
    col = jax.lax.broadcasted_iota(jnp.int32, (seq, bs), 1)
    blocks = []
    for b in range(batch):
        in_blk = (col >= b * seq) & (col < (b + 1) * seq)
        blocks.append(jnp.where(in_blk & keym, 0.0, -1e9).astype(f32))
    bias = jnp.concatenate(blocks, axis=0)                         # (bs, bs)

    # ---- encoder layers (fully unrolled; everything vreg-resident) ----
    for l in range(N_LAYERS):
        W = w_ref[l]                          # (H, SLAB_W) bf16
        xb = x.astype(bf16)
        # Fused QKV projection; the Wo column block rides along for free in
        # the same 128-lane MXU pass (its output columns are ignored).
        qkvo = jnp.dot(xb, W[:, 0:4 * H], preferred_element_type=f32)
        qkvo = qkvo + V[3 * l:3 * l + 1, :]   # [bq|bk|bv|bo] row

        ctx_heads = []
        for h in range(N_HEADS):
            qh = qkvo[:, h * D:(h + 1) * D].astype(bf16)
            kh = qkvo[:, H + h * D:H + (h + 1) * D].astype(bf16)
            vh = qkvo[:, 2 * H + h * D:2 * H + (h + 1) * D].astype(bf16)
            s = jax.lax.dot_general(qh, kh, (((1,), (1,)), ((), ())),
                                    preferred_element_type=f32)
            s = s * scale + bias
            s = s - jnp.max(s, axis=-1, keepdims=True)
            p = jnp.exp(s)
            p = p * pl.reciprocal(jnp.sum(p, axis=-1, keepdims=True),
                                  approx=True)
            ctx_heads.append(jnp.dot(p.astype(bf16), vh,
                                     preferred_element_type=f32))
        ctx = jnp.concatenate(ctx_heads, axis=1)                   # (bs, H)

        attn = jnp.dot(ctx.astype(bf16), W[:, 3 * H:4 * H],
                       preferred_element_type=f32) \
            + V[3 * l:3 * l + 1, 3 * H:4 * H]
        x = layernorm(attn + x,
                      V[3 * l + 1:3 * l + 2, 0:H],
                      V[3 * l + 1:3 * l + 2, H:2 * H])

        # --- feed forward (W2 stored transposed -> NT dot_general) ---
        hmid = gelu(jnp.dot(x.astype(bf16), W[:, 4 * H:4 * H + I],
                            preferred_element_type=f32)
                    + V[3 * l + 2:3 * l + 3, 0:I])
        ff = jax.lax.dot_general(hmid.astype(bf16), W[:, 4 * H + I:4 * H + 2 * I],
                                 (((1,), (1,)), ((), ())),
                                 preferred_element_type=f32) \
            + V[3 * l + 2:3 * l + 3, I:I + H]
        x = layernorm(ff + x,
                      V[3 * l + 1:3 * l + 2, 2 * H:3 * H],
                      V[3 * l + 1:3 * l + 2, 3 * H:4 * H])

    # ---- pooler ([CLS] rows via static slices) + classifier ----
    Wh = w_ref[N_LAYERS]                      # (H, SLAB_W) bf16
    cls_tok = jnp.concatenate([x[b * seq:b * seq + 1, :] for b in range(batch)],
                              axis=0)                              # (B, H)
    pooled = jnp.tanh(jnp.dot(cls_tok.astype(bf16), Wh[:, 0:H],
                              preferred_element_type=f32)
                      + V[r:r + 1, 2 * H:3 * H])
    # nn.Dropout(0.3): identity at inference (eval mode).
    logits = jnp.dot(pooled.astype(bf16), Wh[:, H:H + LANE],
                     preferred_element_type=f32) + V[r + 1:r + 2, :]
    out_ref[...] = logits                                          # (B, 128)


# ---------------------------- parameter init --------------------------------
def init_params(key):
    def normal(k, shape):
        return (0.02 * jax.random.normal(k, shape)).astype(jnp.float32)

    keys = iter(jax.random.split(key, 128))
    params = {
        "word_emb": normal(next(keys), (VOCAB, HIDDEN)),
        "pos_emb": normal(next(keys), (MAX_POS, HIDDEN)),
        "type_emb": normal(next(keys), (2, HIDDEN)),
        "emb_ln_g": jnp.ones((HIDDEN,), jnp.float32),
        "emb_ln_b": jnp.zeros((HIDDEN,), jnp.float32),
        "layers": [],
        "pool_w": normal(next(keys), (HIDDEN, HIDDEN)),
        "pool_b": jnp.zeros((HIDDEN,), jnp.float32),
        "cls_w": normal(next(keys), (HIDDEN, N_CLASSES)),
        "cls_b": jnp.zeros((N_CLASSES,), jnp.float32),
    }
    for _ in range(N_LAYERS):
        params["layers"].append({
            "wq": normal(next(keys), (HIDDEN, HIDDEN)),
            "bq": jnp.zeros((HIDDEN,), jnp.float32),
            "wk": normal(next(keys), (HIDDEN, HIDDEN)),
            "bk": jnp.zeros((HIDDEN,), jnp.float32),
            "wv": normal(next(keys), (HIDDEN, HIDDEN)),
            "bv": jnp.zeros((HIDDEN,), jnp.float32),
            "wo": normal(next(keys), (HIDDEN, HIDDEN)),
            "bo": jnp.zeros((HIDDEN,), jnp.float32),
            "ln1_g": jnp.ones((HIDDEN,), jnp.float32),
            "ln1_b": jnp.zeros((HIDDEN,), jnp.float32),
            "w1": normal(next(keys), (HIDDEN, INTERMEDIATE)),
            "b1": jnp.zeros((INTERMEDIATE,), jnp.float32),
            "w2": normal(next(keys), (INTERMEDIATE, HIDDEN)),
            "b2": jnp.zeros((HIDDEN,), jnp.float32),
            "ln2_g": jnp.ones((HIDDEN,), jnp.float32),
            "ln2_b": jnp.zeros((HIDDEN,), jnp.float32),
        })
    return params


# ------------------------ one-time parameter packing -------------------------
def pack_params(params):
    H, I, L = HIDDEN, INTERMEDIATE, N_LAYERS

    # Embedding table: word rows (sublane-padded) then (pos + type0) rows.
    emb = jnp.zeros((VOCAB_PAD + MAX_POS, H), jnp.float32)
    emb = emb.at[:VOCAB].set(params["word_emb"])
    emb = emb.at[VOCAB_PAD:].set(params["pos_emb"] + params["type_emb"][0][None, :])

    # Weight slab: per layer [Wq|Wk|Wv|Wo|W1|W2^T]; last slab = pooler + cls.
    w = jnp.zeros((L + 1, H, SLAB_W), jnp.float32)
    for l, lyr in enumerate(params["layers"]):
        w = w.at[l, :, 0:H].set(lyr["wq"])
        w = w.at[l, :, H:2 * H].set(lyr["wk"])
        w = w.at[l, :, 2 * H:3 * H].set(lyr["wv"])
        w = w.at[l, :, 3 * H:4 * H].set(lyr["wo"])
        w = w.at[l, :, 4 * H:4 * H + I].set(lyr["w1"])
        w = w.at[l, :, 4 * H + I:4 * H + 2 * I].set(lyr["w2"].T)
    w = w.at[L, :, 0:H].set(params["pool_w"])
    w = w.at[L, :, H:H + N_CLASSES].set(params["cls_w"])

    # Bias / LayerNorm vector slab: (3*L + 2, 128) f32, one vreg.
    v = jnp.zeros((3 * L + 2, 128), jnp.float32)
    for l, lyr in enumerate(params["layers"]):
        v = v.at[3 * l, 0:H].set(lyr["bq"])
        v = v.at[3 * l, H:2 * H].set(lyr["bk"])
        v = v.at[3 * l, 2 * H:3 * H].set(lyr["bv"])
        v = v.at[3 * l, 3 * H:4 * H].set(lyr["bo"])
        v = v.at[3 * l + 1, 0:H].set(lyr["ln1_g"])
        v = v.at[3 * l + 1, H:2 * H].set(lyr["ln1_b"])
        v = v.at[3 * l + 1, 2 * H:3 * H].set(lyr["ln2_g"])
        v = v.at[3 * l + 1, 3 * H:4 * H].set(lyr["ln2_b"])
        v = v.at[3 * l + 2, 0:I].set(lyr["b1"])
        v = v.at[3 * l + 2, I:I + H].set(lyr["b2"])
    v = v.at[3 * L, 0:H].set(params["emb_ln_g"])
    v = v.at[3 * L, H:2 * H].set(params["emb_ln_b"])
    v = v.at[3 * L, 2 * H:3 * H].set(params["pool_b"])
    v = v.at[3 * L + 1, 0:N_CLASSES].set(params["cls_b"])

    return {
        "emb": emb.astype(jnp.bfloat16),     # bf16 MXU operands, smaller DMA
        "w": w.astype(jnp.bfloat16),
        "vecs": v,                           # biases / LN params stay f32
    }


# ------------------------------- forward -------------------------------------
def bert_classifier_forward(packed, input_ids, attention_mask):
    B, S = input_ids.shape
    ids2d = input_ids.reshape(B * S, 1).astype(jnp.int32)
    maskr = attention_mask.reshape(1, B * S).astype(jnp.float32)

    kernel = functools.partial(_bert_fused_kernel, batch=B, seq=S)
    logits_pad = pl.pallas_call(
        kernel,
        out_shape=jax.ShapeDtypeStruct((B, LANE), jnp.float32),
    )(ids2d, maskr, packed["emb"], packed["w"], packed["vecs"])
    return logits_pad[:, :N_CLASSES]


# --------------------------------- main ---------------------------------------
if __name__ == "__main__":
    B, S = 2, 8
    root = jax.random.PRNGKey(0)
    k_ids, k_params = jax.random.split(root)

    input_ids = jax.random.randint(k_ids, (B, S), 0, VOCAB, dtype=jnp.int32)
    lengths = jnp.array([S, S - 2], dtype=jnp.int32)
    attention_mask = (jnp.arange(S)[None, :] < lengths[:, None]).astype(jnp.int32)

    params = init_params(k_params)
    packed = pack_params(params)

    logits = bert_classifier_forward(packed, input_ids, attention_mask)
    jax.block_until_ready(logits)
    assert logits.shape == (B, N_CLASSES)
    print("KERNEL_OK")
</pallas_src>

<mosaic_0001>
module attributes {stable_mosaic.version = 11 : i64} {
  func.func @_bert_fused_kernel(%arg0: memref<16x1xi32, #tpu.memory_space<vmem>>, %arg1: memref<1x16xf32, #tpu.memory_space<vmem>>, %arg2: memref<120x32xbf16, #tpu.memory_space<vmem>>, %arg3: memref<3x32x256xbf16, #tpu.memory_space<vmem>>, %arg4: memref<8x128xf32, #tpu.memory_space<vmem>>, %arg5: memref<2x128xf32, #tpu.memory_space<vmem>>) attributes {dimension_semantics = [], scalar_prefetch = 0 : i64, scratch_operands = 0 : i64, tpu.core_type = #tpu.core_type<tc>} {
    %c0 = arith.constant 0 : index
    %c0_0 = arith.constant 0 : index
    %0 = vector.load %arg4[%c0, %c0_0] : memref<8x128xf32, #tpu.memory_space<vmem>>, vector<8x128xf32>
    %c0_1 = arith.constant 0 : index
    %c0_2 = arith.constant 0 : index
    %1 = vector.load %arg2[%c0_1, %c0_2] : memref<120x32xbf16, #tpu.memory_space<vmem>>, vector<120x32xbf16>
    %c0_3 = arith.constant 0 : index
    %c0_4 = arith.constant 0 : index
    %2 = vector.load %arg0[%c0_3, %c0_4] : memref<16x1xi32, #tpu.memory_space<vmem>>, vector<16x1xi32>
    %3 = tpu.iota {dimensions = array<i32: 1>} : vector<16x120xi32>
    %4 = vector.broadcast %2 : vector<16x1xi32> to vector<16x120xi32>
    %5 = arith.cmpi eq, %4, %3 : vector<16x120xi32>
    %6 = arith.extui %5 : vector<16x120xi1> to vector<16x120xi32>
    %7 = arith.sitofp %6 : vector<16x120xi32> to vector<16x120xf32>
    %8 = arith.truncf %7 : vector<16x120xf32> to vector<16x120xbf16>
    %cst = arith.constant dense<0.000000e+00> : vector<16x32xf32>
    %9 = tpu.matmul %8, %1, %cst {dimension_numbers = #tpu.dot_dimension_numbers<[1], [0], [0], [1], [0, 0, 1, 1], [], []>} : vector<16x120xbf16>, vector<120x32xbf16>, vector<16x32xf32> -> vector<16x32xf32>
    %10 = vector.extract_strided_slice %1 {offsets = [104, 0], sizes = [8, 32], strides = [1, 1]} : vector<120x32xbf16> to vector<8x32xbf16>
    %11 = arith.extf %10 : vector<8x32xbf16> to vector<8x32xf32>
    %12 = tpu.concatenate %11, %11 in 0 : vector<8x32xf32>, vector<8x32xf32> -> vector<16x32xf32>
    %13 = arith.addf %9, %12 : vector<16x32xf32>
    %14 = vector.extract_strided_slice %0 {offsets = [6, 0], sizes = [1, 32], strides = [1, 1]} : vector<8x128xf32> to vector<1x32xf32>
    %15 = vector.extract_strided_slice %0 {offsets = [6, 32], sizes = [1, 32], strides = [1, 1]} : vector<8x128xf32> to vector<1x32xf32>
    %cst_5 = arith.constant dense<0.000000e+00> : vector<16xf32>
    %16 = vector.multi_reduction <add>, %13, %cst_5 [1] : vector<16x32xf32> to vector<16xf32>
    %17 = vector.shape_cast %16 : vector<16xf32> to vector<16x1xf32>
    %cst_6 = arith.constant 3.200000e+01 : f32
    %18 = vector.broadcast %cst_6 : f32 to vector<16x1xf32>
    %19 = arith.divf %17, %18 : vector<16x1xf32>
    %20 = vector.broadcast %19 : vector<16x1xf32> to vector<16x32xf32>
    %21 = arith.subf %13, %20 : vector<16x32xf32>
    %22 = arith.mulf %21, %21 : vector<16x32xf32>
    %cst_7 = arith.constant dense<0.000000e+00> : vector<16xf32>
    %23 = vector.multi_reduction <add>, %22, %cst_7 [1] : vector<16x32xf32> to vector<16xf32>
    %24 = vector.shape_cast %23 : vector<16xf32> to vector<16x1xf32>
    %cst_8 = arith.constant 3.200000e+01 : f32
    %25 = vector.broadcast %cst_8 : f32 to vector<16x1xf32>
    %26 = arith.divf %24, %25 : vector<16x1xf32>
    %cst_9 = arith.constant 9.99999996E-13 : f32
    %27 = vector.broadcast %cst_9 : f32 to vector<16x1xf32>
    %28 = arith.addf %26, %27 : vector<16x1xf32>
    %29 = math.rsqrt %28 : vector<16x1xf32>
    %30 = vector.broadcast %29 : vector<16x1xf32> to vector<16x32xf32>
    %31 = arith.mulf %21, %30 : vector<16x32xf32>
    %32 = vector.broadcast %14 : vector<1x32xf32> to vector<16x32xf32>
    %33 = arith.mulf %31, %32 : vector<16x32xf32>
    %34 = vector.broadcast %15 : vector<1x32xf32> to vector<16x32xf32>
    %35 = arith.addf %33, %34 : vector<16x32xf32>
    %c0_10 = arith.constant 0 : index
    %c0_11 = arith.constant 0 : index
    %36 = vector.load %arg1[%c0_10, %c0_11] : memref<1x16xf32, #tpu.memory_space<vmem>>, vector<1x16xf32>
    %cst_12 = arith.constant 5.000000e-01 : f32
    %37 = vector.broadcast %cst_12 : f32 to vector<1x16xf32>
    %38 = arith.cmpf ogt, %36, %37 : vector<1x16xf32>
    %39 = tpu.iota {dimensions = array<i32: 1>} : vector<8x16xi32>
    %c0_i32 = arith.constant 0 : i32
    %40 = vector.broadcast %c0_i32 : i32 to vector<8x16xi32>
    %41 = arith.cmpi sge, %39, %40 : vector<8x16xi32>
    %c8_i32 = arith.constant 8 : i32
    %42 = vector.broadcast %c8_i32 : i32 to vector<8x16xi32>
    %43 = arith.cmpi slt, %39, %42 : vector<8x16xi32>
    %44 = arith.andi %41, %43 : vector<8x16xi1>
    %45 = vector.broadcast %38 : vector<1x16xi1> to vector<8x16xi1>
    %46 = arith.andi %44, %45 : vector<8x16xi1>
    %cst_13 = arith.constant 0.000000e+00 : f32
    %cst_14 = arith.constant -1.000000e+09 : f32
    %47 = vector.broadcast %cst_13 : f32 to vector<8x16xf32>
    %48 = vector.broadcast %cst_14 : f32 to vector<8x16xf32>
    %49 = arith.select %46, %47, %48 : vector<8x16xi1>, vector<8x16xf32>
    %c8_i32_15 = arith.constant 8 : i32
    %50 = vector.broadcast %c8_i32_15 : i32 to vector<8x16xi32>
    %51 = arith.cmpi sge, %39, %50 : vector<8x16xi32>
    %c16_i32 = arith.constant 16 : i32
    %52 = vector.broadcast %c16_i32 : i32 to vector<8x16xi32>
    %53 = arith.cmpi slt, %39, %52 : vector<8x16xi32>
    %54 = arith.andi %51, %53 : vector<8x16xi1>
    %55 = vector.broadcast %38 : vector<1x16xi1> to vector<8x16xi1>
    %56 = arith.andi %54, %55 : vector<8x16xi1>
    %cst_16 = arith.constant 0.000000e+00 : f32
    %cst_17 = arith.constant -1.000000e+09 : f32
    %57 = vector.broadcast %cst_16 : f32 to vector<8x16xf32>
    %58 = vector.broadcast %cst_17 : f32 to vector<8x16xf32>
    %59 = arith.select %56, %57, %58 : vector<8x16xi1>, vector<8x16xf32>
    %60 = tpu.concatenate %49, %59 in 0 : vector<8x16xf32>, vector<8x16xf32> -> vector<16x16xf32>
    %c0_18 = arith.constant 0 : index
    %c0_19 = arith.constant 0 : index
    %c0_20 = arith.constant 0 : index
    %61 = vector.load %arg3[%c0_18, %c0_19, %c0_20] : memref<3x32x256xbf16, #tpu.memory_space<vmem>>, vector<1x32x256xbf16>
    %62 = vector.shape_cast %61 : vector<1x32x256xbf16> to vector<32x256xbf16>
    %63 = arith.truncf %35 : vector<16x32xf32> to vector<16x32xbf16>
    %64 = vector.extract_strided_slice %62 {offsets = [0, 0], sizes = [32, 128], strides = [1, 1]} : vector<32x256xbf16> to vector<32x128xbf16>
    %cst_21 = arith.constant dense<0.000000e+00> : vector<16x128xf32>
    %65 = tpu.matmul %63, %64, %cst_21 {dimension_numbers = #tpu.dot_dimension_numbers<[1], [0], [0], [1], [0, 0, 1, 1], [], []>} : vector<16x32xbf16>, vector<32x128xbf16>, vector<16x128xf32> -> vector<16x128xf32>
    %66 = vector.extract_strided_slice %0 {offsets = [0, 0], sizes = [1, 128], strides = [1, 1]} : vector<8x128xf32> to vector<1x128xf32>
    %67 = vector.broadcast %66 : vector<1x128xf32> to vector<16x128xf32>
    %68 = arith.addf %65, %67 : vector<16x128xf32>
    %69 = vector.extract_strided_slice %68 {offsets = [0, 0], sizes = [16, 16], strides = [1, 1]} : vector<16x128xf32> to vector<16x16xf32>
    %70 = arith.truncf %69 : vector<16x16xf32> to vector<16x16xbf16>
    %71 = vector.extract_strided_slice %68 {offsets = [0, 32], sizes = [16, 16], strides = [1, 1]} : vector<16x128xf32> to vector<16x16xf32>
    %72 = arith.truncf %71 : vector<16x16xf32> to vector<16x16xbf16>
    %73 = vector.extract_strided_slice %68 {offsets = [0, 64], sizes = [16, 16], strides = [1, 1]} : vector<16x128xf32> to vector<16x16xf32>
    %74 = arith.truncf %73 : vector<16x16xf32> to vector<16x16xbf16>
    %cst_22 = arith.constant dense<0.000000e+00> : vector<16x16xf32>
    %75 = tpu.matmul %70, %72, %cst_22 {dimension_numbers = #tpu.dot_dimension_numbers<[1], [1], [0], [0], [0, 0, 1, 0], [], []>} : vector<16x16xbf16>, vector<16x16xbf16>, vector<16x16xf32> -> vector<16x16xf32>
    %cst_23 = arith.constant 2.500000e-01 : f32
    %76 = vector.broadcast %cst_23 : f32 to vector<16x16xf32>
    %77 = arith.mulf %75, %76 : vector<16x16xf32>
    %78 = arith.addf %77, %60 : vector<16x16xf32>
    %cst_24 = arith.constant dense<0xFF800000> : vector<16xf32>
    %79 = vector.multi_reduction <maximumf>, %78, %cst_24 [1] : vector<16x16xf32> to vector<16xf32>
    %80 = vector.shape_cast %79 : vector<16xf32> to vector<16x1xf32>
    %81 = vector.broadcast %80 : vector<16x1xf32> to vector<16x16xf32>
    %82 = arith.subf %78, %81 : vector<16x16xf32>
    %83 = math.exp %82 : vector<16x16xf32>
    %cst_25 = arith.constant dense<0.000000e+00> : vector<16xf32>
    %84 = vector.multi_reduction <add>, %83, %cst_25 [1] : vector<16x16xf32> to vector<16xf32>
    %85 = vector.shape_cast %84 : vector<16xf32> to vector<16x1xf32>
    %86 = tpu.reciprocal %85 {approx = true} : vector<16x1xf32> -> vector<16x1xf32>
    %87 = vector.broadcast %86 : vector<16x1xf32> to vector<16x16xf32>
    %88 = arith.mulf %83, %87 : vector<16x16xf32>
    %89 = arith.truncf %88 : vector<16x16xf32> to vector<16x16xbf16>
    %cst_26 = arith.constant dense<0.000000e+00> : vector<16x16xf32>
    %90 = tpu.matmul %89, %74, %cst_26 {dimension_numbers = #tpu.dot_dimension_numbers<[1], [0], [0], [1], [0, 0, 1, 1], [], []>} : vector<16x16xbf16>, vector<16x16xbf16>, vector<16x16xf32> -> vector<16x16xf32>
    %91 = vector.extract_strided_slice %68 {offsets = [0, 16], sizes = [16, 16], strides = [1, 1]} : vector<16x128xf32> to vector<16x16xf32>
    %92 = arith.truncf %91 : vector<16x16xf32> to vector<16x16xbf16>
    %93 = vector.extract_strided_slice %68 {offsets = [0, 48], sizes = [16, 16], strides = [1, 1]} : vector<16x128xf32> to vector<16x16xf32>
    %94 = arith.truncf %93 : vector<16x16xf32> to vector<16x16xbf16>
    %95 = vector.extract_strided_slice %68 {offsets = [0, 80], sizes = [16, 16], strides = [1, 1]} : vector<16x128xf32> to vector<16x16xf32>
    %96 = arith.truncf %95 : vector<16x16xf32> to vector<16x16xbf16>
    %cst_27 = arith.constant dense<0.000000e+00> : vector<16x16xf32>
    %97 = tpu.matmul %92, %94, %cst_27 {dimension_numbers = #tpu.dot_dimension_numbers<[1], [1], [0], [0], [0, 0, 1, 0], [], []>} : vector<16x16xbf16>, vector<16x16xbf16>, vector<16x16xf32> -> vector<16x16xf32>
    %cst_28 = arith.constant 2.500000e-01 : f32
    %98 = vector.broadcast %cst_28 : f32 to vector<16x16xf32>
    %99 = arith.mulf %97, %98 : vector<16x16xf32>
    %100 = arith.addf %99, %60 : vector<16x16xf32>
    %cst_29 = arith.constant dense<0xFF800000> : vector<16xf32>
    %101 = vector.multi_reduction <maximumf>, %100, %cst_29 [1] : vector<16x16xf32> to vector<16xf32>
    %102 = vector.shape_cast %101 : vector<16xf32> to vector<16x1xf32>
    %103 = vector.broadcast %102 : vector<16x1xf32> to vector<16x16xf32>
    %104 = arith.subf %100, %103 : vector<16x16xf32>
    %105 = math.exp %104 : vector<16x16xf32>
    %cst_30 = arith.constant dense<0.000000e+00> : vector<16xf32>
    %106 = vector.multi_reduction <add>, %105, %cst_30 [1] : vector<16x16xf32> to vector<16xf32>
    %107 = vector.shape_cast %106 : vector<16xf32> to vector<16x1xf32>
    %108 = tpu.reciprocal %107 {approx = true} : vector<16x1xf32> -> vector<16x1xf32>
    %109 = vector.broadcast %108 : vector<16x1xf32> to vector<16x16xf32>
    %110 = arith.mulf %105, %109 : vector<16x16xf32>
    %111 = arith.truncf %110 : vector<16x16xf32> to vector<16x16xbf16>
    %cst_31 = arith.constant dense<0.000000e+00> : vector<16x16xf32>
    %112 = tpu.matmul %111, %96, %cst_31 {dimension_numbers = #tpu.dot_dimension_numbers<[1], [0], [0], [1], [0, 0, 1, 1], [], []>} : vector<16x16xbf16>, vector<16x16xbf16>, vector<16x16xf32> -> vector<16x16xf32>
    %113 = tpu.concatenate %90, %112 in 1 : vector<16x16xf32>, vector<16x16xf32> -> vector<16x32xf32>
    %114 = arith.truncf %113 : vector<16x32xf32> to vector<16x32xbf16>
    %115 = vector.extract_strided_slice %62 {offsets = [0, 96], sizes = [32, 32], strides = [1, 1]} : vector<32x256xbf16> to vector<32x32xbf16>
    %cst_32 = arith.constant dense<0.000000e+00> : vector<16x32xf32>
    %116 = tpu.matmul %114, %115, %cst_32 {dimension_numbers = #tpu.dot_dimension_numbers<[1], [0], [0], [1], [0, 0, 1, 1], [], []>} : vector<16x32xbf16>, vector<32x32xbf16>, vector<16x32xf32> -> vector<16x32xf32>
    %117 = vector.extract_strided_slice %0 {offsets = [0, 96], sizes = [1, 32], strides = [1, 1]} : vector<8x128xf32> to vector<1x32xf32>
    %118 = vector.broadcast %117 : vector<1x32xf32> to vector<16x32xf32>
    %119 = arith.addf %116, %118 : vector<16x32xf32>
    %120 = arith.addf %119, %35 : vector<16x32xf32>
    %121 = vector.extract_strided_slice %0 {offsets = [1, 0], sizes = [1, 32], strides = [1, 1]} : vector<8x128xf32> to vector<1x32xf32>
    %122 = vector.extract_strided_slice %0 {offsets = [1, 32], sizes = [1, 32], strides = [1, 1]} : vector<8x128xf32> to vector<1x32xf32>
    %cst_33 = arith.constant dense<0.000000e+00> : vector<16xf32>
    %123 = vector.multi_reduction <add>, %120, %cst_33 [1] : vector<16x32xf32> to vector<16xf32>
    %124 = vector.shape_cast %123 : vector<16xf32> to vector<16x1xf32>
    %cst_34 = arith.constant 3.200000e+01 : f32
    %125 = vector.broadcast %cst_34 : f32 to vector<16x1xf32>
    %126 = arith.divf %124, %125 : vector<16x1xf32>
    %127 = vector.broadcast %126 : vector<16x1xf32> to vector<16x32xf32>
    %128 = arith.subf %120, %127 : vector<16x32xf32>
    %129 = arith.mulf %128, %128 : vector<16x32xf32>
    %cst_35 = arith.constant dense<0.000000e+00> : vector<16xf32>
    %130 = vector.multi_reduction <add>, %129, %cst_35 [1] : vector<16x32xf32> to vector<16xf32>
    %131 = vector.shape_cast %130 : vector<16xf32> to vector<16x1xf32>
    %cst_36 = arith.constant 3.200000e+01 : f32
    %132 = vector.broadcast %cst_36 : f32 to vector<16x1xf32>
    %133 = arith.divf %131, %132 : vector<16x1xf32>
    %cst_37 = arith.constant 9.99999996E-13 : f32
    %134 = vector.broadcast %cst_37 : f32 to vector<16x1xf32>
    %135 = arith.addf %133, %134 : vector<16x1xf32>
    %136 = math.rsqrt %135 : vector<16x1xf32>
    %137 = vector.broadcast %136 : vector<16x1xf32> to vector<16x32xf32>
    %138 = arith.mulf %128, %137 : vector<16x32xf32>
    %139 = vector.broadcast %121 : vector<1x32xf32> to vector<16x32xf32>
    %140 = arith.mulf %138, %139 : vector<16x32xf32>
    %141 = vector.broadcast %122 : vector<1x32xf32> to vector<16x32xf32>
    %142 = arith.addf %140, %141 : vector<16x32xf32>
    %143 = arith.truncf %142 : vector<16x32xf32> to vector<16x32xbf16>
    %144 = vector.extract_strided_slice %62 {offsets = [0, 128], sizes = [32, 64], strides = [1, 1]} : vector<32x256xbf16> to vector<32x64xbf16>
    %cst_38 = arith.constant dense<0.000000e+00> : vector<16x64xf32>
    %145 = tpu.matmul %143, %144, %cst_38 {dimension_numbers = #tpu.dot_dimension_numbers<[1], [0], [0], [1], [0, 0, 1, 1], [], []>} : vector<16x32xbf16>, vector<32x64xbf16>, vector<16x64xf32> -> vector<16x64xf32>
    %146 = vector.extract_strided_slice %0 {offsets = [2, 0], sizes = [1, 64], strides = [1, 1]} : vector<8x128xf32> to vector<1x64xf32>
    %147 = vector.broadcast %146 : vector<1x64xf32> to vector<16x64xf32>
    %148 = arith.addf %145, %147 : vector<16x64xf32>
    %cst_39 = arith.constant 5.000000e-01 : f32
    %149 = vector.broadcast %cst_39 : f32 to vector<16x64xf32>
    %150 = arith.mulf %149, %148 : vector<16x64xf32>
    %cst_40 = arith.constant 4.471500e-02 : f32
    %151 = vector.broadcast %cst_40 : f32 to vector<16x64xf32>
    %152 = arith.mulf %151, %148 : vector<16x64xf32>
    %153 = arith.mulf %152, %148 : vector<16x64xf32>
    %154 = arith.mulf %153, %148 : vector<16x64xf32>
    %155 = arith.addf %148, %154 : vector<16x64xf32>
    %cst_41 = arith.constant 0.797884583 : f32
    %156 = vector.broadcast %cst_41 : f32 to vector<16x64xf32>
    %157 = arith.mulf %156, %155 : vector<16x64xf32>
    %158 = math.tanh %157 : vector<16x64xf32>
    %cst_42 = arith.constant 1.000000e+00 : f32
    %159 = vector.broadcast %cst_42 : f32 to vector<16x64xf32>
    %160 = arith.addf %159, %158 : vector<16x64xf32>
    %161 = arith.mulf %150, %160 : vector<16x64xf32>
    %162 = arith.truncf %161 : vector<16x64xf32> to vector<16x64xbf16>
    %163 = vector.extract_strided_slice %62 {offsets = [0, 192], sizes = [32, 64], strides = [1, 1]} : vector<32x256xbf16> to vector<32x64xbf16>
    %cst_43 = arith.constant dense<0.000000e+00> : vector<16x32xf32>
    %164 = tpu.matmul %162, %163, %cst_43 {dimension_numbers = #tpu.dot_dimension_numbers<[1], [1], [0], [0], [0, 0, 1, 0], [], []>} : vector<16x64xbf16>, vector<32x64xbf16>, vector<16x32xf32> -> vector<16x32xf32>
    %165 = vector.extract_strided_slice %0 {offsets = [2, 64], sizes = [1, 32], strides = [1, 1]} : vector<8x128xf32> to vector<1x32xf32>
    %166 = vector.broadcast %165 : vector<1x32xf32> to vector<16x32xf32>
    %167 = arith.addf %164, %166 : vector<16x32xf32>
    %168 = arith.addf %167, %142 : vector<16x32xf32>
    %169 = vector.extract_strided_slice %0 {offsets = [1, 64], sizes = [1, 32], strides = [1, 1]} : vector<8x128xf32> to vector<1x32xf32>
    %170 = vector.extract_strided_slice %0 {offsets = [1, 96], sizes = [1, 32], strides = [1, 1]} : vector<8x128xf32> to vector<1x32xf32>
    %cst_44 = arith.constant dense<0.000000e+00> : vector<16xf32>
    %171 = vector.multi_reduction <add>, %168, %cst_44 [1] : vector<16x32xf32> to vector<16xf32>
    %172 = vector.shape_cast %171 : vector<16xf32> to vector<16x1xf32>
    %cst_45 = arith.constant 3.200000e+01 : f32
    %173 = vector.broadcast %cst_45 : f32 to vector<16x1xf32>
    %174 = arith.divf %172, %173 : vector<16x1xf32>
    %175 = vector.broadcast %174 : vector<16x1xf32> to vector<16x32xf32>
    %176 = arith.subf %168, %175 : vector<16x32xf32>
    %177 = arith.mulf %176, %176 : vector<16x32xf32>
    %cst_46 = arith.constant dense<0.000000e+00> : vector<16xf32>
    %178 = vector.multi_reduction <add>, %177, %cst_46 [1] : vector<16x32xf32> to vector<16xf32>
    %179 = vector.shape_cast %178 : vector<16xf32> to vector<16x1xf32>
    %cst_47 = arith.constant 3.200000e+01 : f32
    %180 = vector.broadcast %cst_47 : f32 to vector<16x1xf32>
    %181 = arith.divf %179, %180 : vector<16x1xf32>
    %cst_48 = arith.constant 9.99999996E-13 : f32
    %182 = vector.broadcast %cst_48 : f32 to vector<16x1xf32>
    %183 = arith.addf %181, %182 : vector<16x1xf32>
    %184 = math.rsqrt %183 : vector<16x1xf32>
    %185 = vector.broadcast %184 : vector<16x1xf32> to vector<16x32xf32>
    %186 = arith.mulf %176, %185 : vector<16x32xf32>
    %187 = vector.broadcast %169 : vector<1x32xf32> to vector<16x32xf32>
    %188 = arith.mulf %186, %187 : vector<16x32xf32>
    %189 = vector.broadcast %170 : vector<1x32xf32> to vector<16x32xf32>
    %190 = arith.addf %188, %189 : vector<16x32xf32>
    %c1 = arith.constant 1 : index
    %c0_49 = arith.constant 0 : index
    %c0_50 = arith.constant 0 : index
    %191 = vector.load %arg3[%c1, %c0_49, %c0_50] : memref<3x32x256xbf16, #tpu.memory_space<vmem>>, vector<1x32x256xbf16>
    %192 = vector.shape_cast %191 : vector<1x32x256xbf16> to vector<32x256xbf16>
    %193 = arith.truncf %190 : vector<16x32xf32> to vector<16x32xbf16>
    %194 = vector.extract_strided_slice %192 {offsets = [0, 0], sizes = [32, 128], strides = [1, 1]} : vector<32x256xbf16> to vector<32x128xbf16>
    %cst_51 = arith.constant dense<0.000000e+00> : vector<16x128xf32>
    %195 = tpu.matmul %193, %194, %cst_51 {dimension_numbers = #tpu.dot_dimension_numbers<[1], [0], [0], [1], [0, 0, 1, 1], [], []>} : vector<16x32xbf16>, vector<32x128xbf16>, vector<16x128xf32> -> vector<16x128xf32>
    %196 = vector.extract_strided_slice %0 {offsets = [3, 0], sizes = [1, 128], strides = [1, 1]} : vector<8x128xf32> to vector<1x128xf32>
    %197 = vector.broadcast %196 : vector<1x128xf32> to vector<16x128xf32>
    %198 = arith.addf %195, %197 : vector<16x128xf32>
    %199 = vector.extract_strided_slice %198 {offsets = [0, 0], sizes = [16, 16], strides = [1, 1]} : vector<16x128xf32> to vector<16x16xf32>
    %200 = arith.truncf %199 : vector<16x16xf32> to vector<16x16xbf16>
    %201 = vector.extract_strided_slice %198 {offsets = [0, 32], sizes = [16, 16], strides = [1, 1]} : vector<16x128xf32> to vector<16x16xf32>
    %202 = arith.truncf %201 : vector<16x16xf32> to vector<16x16xbf16>
    %203 = vector.extract_strided_slice %198 {offsets = [0, 64], sizes = [16, 16], strides = [1, 1]} : vector<16x128xf32> to vector<16x16xf32>
    %204 = arith.truncf %203 : vector<16x16xf32> to vector<16x16xbf16>
    %cst_52 = arith.constant dense<0.000000e+00> : vector<16x16xf32>
    %205 = tpu.matmul %200, %202, %cst_52 {dimension_numbers = #tpu.dot_dimension_numbers<[1], [1], [0], [0], [0, 0, 1, 0], [], []>} : vector<16x16xbf16>, vector<16x16xbf16>, vector<16x16xf32> -> vector<16x16xf32>
    %cst_53 = arith.constant 2.500000e-01 : f32
    %206 = vector.broadcast %cst_53 : f32 to vector<16x16xf32>
    %207 = arith.mulf %205, %206 : vector<16x16xf32>
    %208 = arith.addf %207, %60 : vector<16x16xf32>
    %cst_54 = arith.constant dense<0xFF800000> : vector<16xf32>
    %209 = vector.multi_reduction <maximumf>, %208, %cst_54 [1] : vector<16x16xf32> to vector<16xf32>
    %210 = vector.shape_cast %209 : vector<16xf32> to vector<16x1xf32>
    %211 = vector.broadcast %210 : vector<16x1xf32> to vector<16x16xf32>
    %212 = arith.subf %208, %211 : vector<16x16xf32>
    %213 = math.exp %212 : vector<16x16xf32>
    %cst_55 = arith.constant dense<0.000000e+00> : vector<16xf32>
    %214 = vector.multi_reduction <add>, %213, %cst_55 [1] : vector<16x16xf32> to vector<16xf32>
    %215 = vector.shape_cast %214 : vector<16xf32> to vector<16x1xf32>
    %216 = tpu.reciprocal %215 {approx = true} : vector<16x1xf32> -> vector<16x1xf32>
    %217 = vector.broadcast %216 : vector<16x1xf32> to vector<16x16xf32>
    %218 = arith.mulf %213, %217 : vector<16x16xf32>
    %219 = arith.truncf %218 : vector<16x16xf32> to vector<16x16xbf16>
    %cst_56 = arith.constant dense<0.000000e+00> : vector<16x16xf32>
    %220 = tpu.matmul %219, %204, %cst_56 {dimension_numbers = #tpu.dot_dimension_numbers<[1], [0], [0], [1], [0, 0, 1, 1], [], []>} : vector<16x16xbf16>, vector<16x16xbf16>, vector<16x16xf32> -> vector<16x16xf32>
    %221 = vector.extract_strided_slice %198 {offsets = [0, 16], sizes = [16, 16], strides = [1, 1]} : vector<16x128xf32> to vector<16x16xf32>
    %222 = arith.truncf %221 : vector<16x16xf32> to vector<16x16xbf16>
    %223 = vector.extract_strided_slice %198 {offsets = [0, 48], sizes = [16, 16], strides = [1, 1]} : vector<16x128xf32> to vector<16x16xf32>
    %224 = arith.truncf %223 : vector<16x16xf32> to vector<16x16xbf16>
    %225 = vector.extract_strided_slice %198 {offsets = [0, 80], sizes = [16, 16], strides = [1, 1]} : vector<16x128xf32> to vector<16x16xf32>
    %226 = arith.truncf %225 : vector<16x16xf32> to vector<16x16xbf16>
    %cst_57 = arith.constant dense<0.000000e+00> : vector<16x16xf32>
    %227 = tpu.matmul %222, %224, %cst_57 {dimension_numbers = #tpu.dot_dimension_numbers<[1], [1], [0], [0], [0, 0, 1, 0], [], []>} : vector<16x16xbf16>, vector<16x16xbf16>, vector<16x16xf32> -> vector<16x16xf32>
    %cst_58 = arith.constant 2.500000e-01 : f32
    %228 = vector.broadcast %cst_58 : f32 to vector<16x16xf32>
    %229 = arith.mulf %227, %228 : vector<16x16xf32>
    %230 = arith.addf %229, %60 : vector<16x16xf32>
    %cst_59 = arith.constant dense<0xFF800000> : vector<16xf32>
    %231 = vector.multi_reduction <maximumf>, %230, %cst_59 [1] : vector<16x16xf32> to vector<16xf32>
    %232 = vector.shape_cast %231 : vector<16xf32> to vector<16x1xf32>
    %233 = vector.broadcast %232 : vector<16x1xf32> to vector<16x16xf32>
    %234 = arith.subf %230, %233 : vector<16x16xf32>
    %235 = math.exp %234 : vector<16x16xf32>
    %cst_60 = arith.constant dense<0.000000e+00> : vector<16xf32>
    %236 = vector.multi_reduction <add>, %235, %cst_60 [1] : vector<16x16xf32> to vector<16xf32>
    %237 = vector.shape_cast %236 : vector<16xf32> to vector<16x1xf32>
    %238 = tpu.reciprocal %237 {approx = true} : vector<16x1xf32> -> vector<16x1xf32>
    %239 = vector.broadcast %238 : vector<16x1xf32> to vector<16x16xf32>
    %240 = arith.mulf %235, %239 : vector<16x16xf32>
    %241 = arith.truncf %240 : vector<16x16xf32> to vector<16x16xbf16>
    %cst_61 = arith.constant dense<0.000000e+00> : vector<16x16xf32>
    %242 = tpu.matmul %241, %226, %cst_61 {dimension_numbers = #tpu.dot_dimension_numbers<[1], [0], [0], [1], [0, 0, 1, 1], [], []>} : vector<16x16xbf16>, vector<16x16xbf16>, vector<16x16xf32> -> vector<16x16xf32>
    %243 = tpu.concatenate %220, %242 in 1 : vector<16x16xf32>, vector<16x16xf32> -> vector<16x32xf32>
    %244 = arith.truncf %243 : vector<16x32xf32> to vector<16x32xbf16>
    %245 = vector.extract_strided_slice %192 {offsets = [0, 96], sizes = [32, 32], strides = [1, 1]} : vector<32x256xbf16> to vector<32x32xbf16>
    %cst_62 = arith.constant dense<0.000000e+00> : vector<16x32xf32>
    %246 = tpu.matmul %244, %245, %cst_62 {dimension_numbers = #tpu.dot_dimension_numbers<[1], [0], [0], [1], [0, 0, 1, 1], [], []>} : vector<16x32xbf16>, vector<32x32xbf16>, vector<16x32xf32> -> vector<16x32xf32>
    %247 = vector.extract_strided_slice %0 {offsets = [3, 96], sizes = [1, 32], strides = [1, 1]} : vector<8x128xf32> to vector<1x32xf32>
    %248 = vector.broadcast %247 : vector<1x32xf32> to vector<16x32xf32>
    %249 = arith.addf %246, %248 : vector<16x32xf32>
    %250 = arith.addf %249, %190 : vector<16x32xf32>
    %251 = vector.extract_strided_slice %0 {offsets = [4, 0], sizes = [1, 32], strides = [1, 1]} : vector<8x128xf32> to vector<1x32xf32>
    %252 = vector.extract_strided_slice %0 {offsets = [4, 32], sizes = [1, 32], strides = [1, 1]} : vector<8x128xf32> to vector<1x32xf32>
    %cst_63 = arith.constant dense<0.000000e+00> : vector<16xf32>
    %253 = vector.multi_reduction <add>, %250, %cst_63 [1] : vector<16x32xf32> to vector<16xf32>
    %254 = vector.shape_cast %253 : vector<16xf32> to vector<16x1xf32>
    %cst_64 = arith.constant 3.200000e+01 : f32
    %255 = vector.broadcast %cst_64 : f32 to vector<16x1xf32>
    %256 = arith.divf %254, %255 : vector<16x1xf32>
    %257 = vector.broadcast %256 : vector<16x1xf32> to vector<16x32xf32>
    %258 = arith.subf %250, %257 : vector<16x32xf32>
    %259 = arith.mulf %258, %258 : vector<16x32xf32>
    %cst_65 = arith.constant dense<0.000000e+00> : vector<16xf32>
    %260 = vector.multi_reduction <add>, %259, %cst_65 [1] : vector<16x32xf32> to vector<16xf32>
    %261 = vector.shape_cast %260 : vector<16xf32> to vector<16x1xf32>
    %cst_66 = arith.constant 3.200000e+01 : f32
    %262 = vector.broadcast %cst_66 : f32 to vector<16x1xf32>
    %263 = arith.divf %261, %262 : vector<16x1xf32>
    %cst_67 = arith.constant 9.99999996E-13 : f32
    %264 = vector.broadcast %cst_67 : f32 to vector<16x1xf32>
    %265 = arith.addf %263, %264 : vector<16x1xf32>
    %266 = math.rsqrt %265 : vector<16x1xf32>
    %267 = vector.broadcast %266 : vector<16x1xf32> to vector<16x32xf32>
    %268 = arith.mulf %258, %267 : vector<16x32xf32>
    %269 = vector.broadcast %251 : vector<1x32xf32> to vector<16x32xf32>
    %270 = arith.mulf %268, %269 : vector<16x32xf32>
    %271 = vector.broadcast %252 : vector<1x32xf32> to vector<16x32xf32>
    %272 = arith.addf %270, %271 : vector<16x32xf32>
    %273 = arith.truncf %272 : vector<16x32xf32> to vector<16x32xbf16>
    %274 = vector.extract_strided_slice %192 {offsets = [0, 128], sizes = [32, 64], strides = [1, 1]} : vector<32x256xbf16> to vector<32x64xbf16>
    %cst_68 = arith.constant dense<0.000000e+00> : vector<16x64xf32>
    %275 = tpu.matmul %273, %274, %cst_68 {dimension_numbers = #tpu.dot_dimension_numbers<[1], [0], [0], [1], [0, 0, 1, 1], [], []>} : vector<16x32xbf16>, vector<32x64xbf16>, vector<16x64xf32> -> vector<16x64xf32>
    %276 = vector.extract_strided_slice %0 {offsets = [5, 0], sizes = [1, 64], strides = [1, 1]} : vector<8x128xf32> to vector<1x64xf32>
    %277 = vector.broadcast %276 : vector<1x64xf32> to vector<16x64xf32>
    %278 = arith.addf %275, %277 : vector<16x64xf32>
    %cst_69 = arith.constant 5.000000e-01 : f32
    %279 = vector.broadcast %cst_69 : f32 to vector<16x64xf32>
    %280 = arith.mulf %279, %278 : vector<16x64xf32>
    %cst_70 = arith.constant 4.471500e-02 : f32
    %281 = vector.broadcast %cst_70 : f32 to vector<16x64xf32>
    %282 = arith.mulf %281, %278 : vector<16x64xf32>
    %283 = arith.mulf %282, %278 : vector<16x64xf32>
    %284 = arith.mulf %283, %278 : vector<16x64xf32>
    %285 = arith.addf %278, %284 : vector<16x64xf32>
    %cst_71 = arith.constant 0.797884583 : f32
    %286 = vector.broadcast %cst_71 : f32 to vector<16x64xf32>
    %287 = arith.mulf %286, %285 : vector<16x64xf32>
    %288 = math.tanh %287 : vector<16x64xf32>
    %cst_72 = arith.constant 1.000000e+00 : f32
    %289 = vector.broadcast %cst_72 : f32 to vector<16x64xf32>
    %290 = arith.addf %289, %288 : vector<16x64xf32>
    %291 = arith.mulf %280, %290 : vector<16x64xf32>
    %292 = arith.truncf %291 : vector<16x64xf32> to vector<16x64xbf16>
    %293 = vector.extract_strided_slice %192 {offsets = [0, 192], sizes = [32, 64], strides = [1, 1]} : vector<32x256xbf16> to vector<32x64xbf16>
    %cst_73 = arith.constant dense<0.000000e+00> : vector<16x32xf32>
    %294 = tpu.matmul %292, %293, %cst_73 {dimension_numbers = #tpu.dot_dimension_numbers<[1], [1], [0], [0], [0, 0, 1, 0], [], []>} : vector<16x64xbf16>, vector<32x64xbf16>, vector<16x32xf32> -> vector<16x32xf32>
    %295 = vector.extract_strided_slice %0 {offsets = [5, 64], sizes = [1, 32], strides = [1, 1]} : vector<8x128xf32> to vector<1x32xf32>
    %296 = vector.broadcast %295 : vector<1x32xf32> to vector<16x32xf32>
    %297 = arith.addf %294, %296 : vector<16x32xf32>
    %298 = arith.addf %297, %272 : vector<16x32xf32>
    %299 = vector.extract_strided_slice %0 {offsets = [4, 64], sizes = [1, 32], strides = [1, 1]} : vector<8x128xf32> to vector<1x32xf32>
    %300 = vector.extract_strided_slice %0 {offsets = [4, 96], sizes = [1, 32], strides = [1, 1]} : vector<8x128xf32> to vector<1x32xf32>
    %cst_74 = arith.constant dense<0.000000e+00> : vector<16xf32>
    %301 = vector.multi_reduction <add>, %298, %cst_74 [1] : vector<16x32xf32> to vector<16xf32>
    %302 = vector.shape_cast %301 : vector<16xf32> to vector<16x1xf32>
    %cst_75 = arith.constant 3.200000e+01 : f32
    %303 = vector.broadcast %cst_75 : f32 to vector<16x1xf32>
    %304 = arith.divf %302, %303 : vector<16x1xf32>
    %305 = vector.broadcast %304 : vector<16x1xf32> to vector<16x32xf32>
    %306 = arith.subf %298, %305 : vector<16x32xf32>
    %307 = arith.mulf %306, %306 : vector<16x32xf32>
    %cst_76 = arith.constant dense<0.000000e+00> : vector<16xf32>
    %308 = vector.multi_reduction <add>, %307, %cst_76 [1] : vector<16x32xf32> to vector<16xf32>
    %309 = vector.shape_cast %308 : vector<16xf32> to vector<16x1xf32>
    %cst_77 = arith.constant 3.200000e+01 : f32
    %310 = vector.broadcast %cst_77 : f32 to vector<16x1xf32>
    %311 = arith.divf %309, %310 : vector<16x1xf32>
    %cst_78 = arith.constant 9.99999996E-13 : f32
    %312 = vector.broadcast %cst_78 : f32 to vector<16x1xf32>
    %313 = arith.addf %311, %312 : vector<16x1xf32>
    %314 = math.rsqrt %313 : vector<16x1xf32>
    %315 = vector.broadcast %314 : vector<16x1xf32> to vector<16x32xf32>
    %316 = arith.mulf %306, %315 : vector<16x32xf32>
    %317 = vector.broadcast %299 : vector<1x32xf32> to vector<16x32xf32>
    %318 = arith.mulf %316, %317 : vector<16x32xf32>
    %319 = vector.broadcast %300 : vector<1x32xf32> to vector<16x32xf32>
    %320 = arith.addf %318, %319 : vector<16x32xf32>
    %c2 = arith.constant 2 : index
    %c0_79 = arith.constant 0 : index
    %c0_80 = arith.constant 0 : index
    %321 = vector.load %arg3[%c2, %c0_79, %c0_80] : memref<3x32x256xbf16, #tpu.memory_space<vmem>>, vector<1x32x256xbf16>
    %322 = vector.shape_cast %321 : vector<1x32x256xbf16> to vector<32x256xbf16>
    %323 = vector.extract_strided_slice %320 {offsets = [0, 0], sizes = [1, 32], strides = [1, 1]} : vector<16x32xf32> to vector<1x32xf32>
    %324 = vector.extract_strided_slice %320 {offsets = [8, 0], sizes = [1, 32], strides = [1, 1]} : vector<16x32xf32> to vector<1x32xf32>
    %325 = tpu.concatenate %323, %324 in 0 : vector<1x32xf32>, vector<1x32xf32> -> vector<2x32xf32>
    %326 = arith.truncf %325 : vector<2x32xf32> to vector<2x32xbf16>
    %327 = vector.extract_strided_slice %322 {offsets = [0, 0], sizes = [32, 32], strides = [1, 1]} : vector<32x256xbf16> to vector<32x32xbf16>
    %cst_81 = arith.constant dense<0.000000e+00> : vector<2x32xf32>
    %328 = tpu.matmul %326, %327, %cst_81 {dimension_numbers = #tpu.dot_dimension_numbers<[1], [0], [0], [1], [0, 0, 1, 1], [], []>} : vector<2x32xbf16>, vector<32x32xbf16>, vector<2x32xf32> -> vector<2x32xf32>
    %329 = vector.extract_strided_slice %0 {offsets = [6, 64], sizes = [1, 32], strides = [1, 1]} : vector<8x128xf32> to vector<1x32xf32>
    %330 = vector.broadcast %329 : vector<1x32xf32> to vector<2x32xf32>
    %331 = arith.addf %328, %330 : vector<2x32xf32>
    %332 = math.tanh %331 : vector<2x32xf32>
    %333 = arith.truncf %332 : vector<2x32xf32> to vector<2x32xbf16>
    %334 = vector.extract_strided_slice %322 {offsets = [0, 32], sizes = [32, 128], strides = [1, 1]} : vector<32x256xbf16> to vector<32x128xbf16>
    %cst_82 = arith.constant dense<0.000000e+00> : vector<2x128xf32>
    %335 = tpu.matmul %333, %334, %cst_82 {dimension_numbers = #tpu.dot_dimension_numbers<[1], [0], [0], [1], [0, 0, 1, 1], [], []>} : vector<2x32xbf16>, vector<32x128xbf16>, vector<2x128xf32> -> vector<2x128xf32>
    %336 = vector.extract_strided_slice %0 {offsets = [7, 0], sizes = [1, 128], strides = [1, 1]} : vector<8x128xf32> to vector<1x128xf32>
    %337 = vector.broadcast %336 : vector<1x128xf32> to vector<2x128xf32>
    %338 = arith.addf %335, %337 : vector<2x128xf32>
    %c0_83 = arith.constant 0 : index
    %c0_84 = arith.constant 0 : index
    %339 = vector.load %arg5[%c0_83, %c0_84] : memref<2x128xf32, #tpu.memory_space<vmem>>, vector<2x128xf32>
    tpu.vector_store %arg5[%c0_83, %c0_84], %338 {strides = array<i32>} : memref<2x128xf32, #tpu.memory_space<vmem>>, vector<2x128xf32>,
    return
  }
}

</mosaic_0001>

<llo_original>
// kernel: tpu_custom_call.1
$region0: #{tpu_custom_call.1}
  #allocation0 [shape = 'u32[]', space=smem, size = 0x4, offset = 0x4, fixed_abs, tag = 'smem constant byte address 0x4 - core index']
  #allocation1 [shape = 'u32[144,128]{1,0:T(1,128)}', space=vmem, size = 0x12000, scoped, tag = 'internal scratch']
  %s0 = inlined_call_operand.vmem [shape: s32[16,1], index: 0, kind: input, shape index: {}]
  %s1 = inlined_call_operand.hbm [shape: f32[1,16], index: 1, kind: input, shape index: {}]
  %s2 = inlined_call_operand.vmem [shape: bf16[120,32], index: 2, kind: input, shape index: {}]
  %s3 = inlined_call_operand.vmem [shape: bf16[3,32,256], index: 3, kind: input, shape index: {}]
  %s4 = inlined_call_operand.vmem [shape: f32[8,128], index: 4, kind: input, shape index: {}]
  %s5 = inlined_call_operand.hbm [shape: f32[2,128], index: 5, kind: output, shape index: {}]
  %s6 = sld [smem:[#allocation0]]
  $region34: #{tpu_custom_call.1} parent=0
    _
  %s8 = ssub.s32 1, %s6
  %s9 = scalar_select 0, %s8, %s6
  $region1: #{tpu_custom_call.1} parent=0
    #allocation2 [shape = 'u8[512]{0}', space=vmem, size = 0x400, scoped, tag = 'input window, operand 1, single buffered']
    #allocation3 [shape = 's32[1]{0}', space=sflag, size = 0x4, scoped, tag = 'scoped memory for tpu_custom_call.1']
    #allocation4 [shape = 's32[1]{0}', space=sflag, size = 0x4, scoped, tag = 'scoped memory for tpu_custom_call.1']
    #allocation5 [shape = 'u8[1024]{0}', space=vmem, size = 0x400, scoped, tag = 'output window, operand 0, single buffered']
    %10 = vsyncpa [#allocation3], 0
    %11 = vsyncpa [#allocation4], 0
    // Predicated region
    $region2: #{tpu_custom_call.1} parent=1 // pred_check
      _
    $region3: #{tpu_custom_call.1} parent=1 // pred_check_branch
      %13 = sbr.rel (0) target = $region5
    $region4: #{tpu_custom_call.1} parent=1 // pred_region
      _
    $region5: #{tpu_custom_call.1} parent=1 // pred_fallthru
      _
    // Predicated region
    $region6: #{tpu_custom_call.1} parent=1 // pred_check
      _
    $region7: #{tpu_custom_call.1} parent=1 // pred_check_branch
      %15 = sbr.rel (0) target = $region9
    $region8: #{tpu_custom_call.1} parent=1 // pred_region
      %s17 = ssub.s32 16, 16
      %18 = vsyncadd [#allocation3], %s17
      %s20 = sshll.u32 [#allocation2], 4
      %s21 = int_to_ptr.vmem [resolvable:$true] %s20
      %23 = dma.hbm_to_vmem [thread:$0]  %s1, 16, %s21, [#allocation3]
    $region9: #{tpu_custom_call.1} parent=1 // pred_fallthru
      _
    // Predicated region
    $region10: #{tpu_custom_call.1} parent=1 // pred_check
      _
    $region11: #{tpu_custom_call.1} parent=1 // pred_check_branch
      %25 = sbr.rel (0) target = $region13
    $region12: #{tpu_custom_call.1} parent=1 // pred_region
      _
    $region13: #{tpu_custom_call.1} parent=1 // pred_fallthru
      _
    // Predicated region
    $region14: #{tpu_custom_call.1} parent=1 // pred_check
      _
    $region15: #{tpu_custom_call.1} parent=1 // pred_check_branch
      %27 = sbr.rel (0) target = $region17
    $region16: #{tpu_custom_call.1} parent=1 // pred_region
      _
    $region17: #{tpu_custom_call.1} parent=1 // pred_fallthru
      _
    // Predicated region
    $region18: #{tpu_custom_call.1} parent=1 // pred_check
      _
    $region19: #{tpu_custom_call.1} parent=1 // pred_check_branch
      %29 = sbr.rel (0) target = $region21
    $region20: #{tpu_custom_call.1} parent=1 // pred_region
      _
    $region21: #{tpu_custom_call.1} parent=1 // pred_fallthru
      _
    // Predicated region
    $region22: #{tpu_custom_call.1} parent=1 // pred_check
      _
    $region23: #{tpu_custom_call.1} parent=1 // pred_check_branch
      %31 = sbr.rel (0) target = $region25
    $region24: #{tpu_custom_call.1} parent=1 // pred_region
      %32 = dma.done [#allocation3], 16
    $region25: #{tpu_custom_call.1} parent=1 // pred_fallthru
      _
    %v34 = vld [vmem:[%s4] sm:$0xff]
    %v35 = vld [vmem:[%s2] sm:$0xf]
    %v36 = vld [vmem:[%s2 + $0x4] sm:$0xf]
    %v37 = vld [vmem:[%s2 + $0x8] sm:$0xf]
    %v38 = vld [vmem:[%s2 + $0xc] sm:$0xf]
    %v39 = vld [vmem:[%s2 + $0x10] sm:$0xf]
    %v40 = vld [vmem:[%s2 + $0x14] sm:$0xf]
    %v41 = vld [vmem:[%s2 + $0x18] sm:$0xf]
    %v42 = vld [vmem:[%s2 + $0x1c] sm:$0xf]
    %v43 = vld [vmem:[%s2 + $0x20] sm:$0xf]
    %v44 = vld [vmem:[%s2 + $0x24] sm:$0xf]
    %v45 = vld [vmem:[%s2 + $0x28] sm:$0xf]
    %v46 = vld [vmem:[%s2 + $0x2c] sm:$0xf]
    %v47 = vld [vmem:[%s2 + $0x30] sm:$0xf]
    %v48 = vld [vmem:[%s2 + $0x34] sm:$0xf]
    %v49 = vld [vmem:[%s2 + $0x38] sm:$0xf]
    %v50 = vld [vmem:[%s0] sm:$0xff]
    %v51 = vld [vmem:[%s0 + $0x8] sm:$0xff]
    %v52 = vlaneseq
    %v53 = vand.u32 %v52, 127
    %54 = vset.pattern.permute.xlu0 0
    %55 = vperm.xlu0 %54, %v50
    %v56 = vpop.permute.xlu0 %55
    %57 = vset.pattern.permute.xlu0 0
    %58 = vperm.xlu0 %57, %v51
    %v59 = vpop.permute.xlu0 %58
    %vm60 = vcmp.eq.s32.totalorder %v56, %v53
    %vm61 = vcmp.eq.s32.totalorder %v59, %v53
    %v62 = vsel %vm60, 1, 0
    %v63 = vsel %vm61, 1, 0
    %v64 = vcvt.s32.f32 %v62
    %v65 = vcvt.s32.f32 %v63
    %v66 = vpack.c.bf16 %v65, %v64
    %v67 = vunpack.c.l.bf16 %v48
    %v83 = vunpack.c.l.b16 %v35
    %v84 = vunpack.c.l.b16 %v36
    %v85 = vunpack.c.l.b16 %v37
    %v86 = vunpack.c.l.b16 %v38
    %v87 = vunpack.c.l.b16 %v39
    %v88 = vunpack.c.l.b16 %v40
    %v89 = vunpack.c.l.b16 %v41
    %v90 = vunpack.c.l.b16 %v42
    %v91 = vunpack.c.l.b16 %v43
    %v92 = vunpack.c.l.b16 %v44
    %v93 = vunpack.c.l.b16 %v45
    %v94 = vunpack.c.l.b16 %v46
    %v95 = vunpack.c.l.b16 %v47
    %v96 = vunpack.c.l.b16 %v48
    %v97 = vunpack.c.l.b16 %v49
    %v98 = vpack.c.b16 %v84, %v83
    %v99 = vpack.c.b16 %v86, %v85
    %v100 = vpack.c.b16 %v88, %v87
    %v101 = vpack.c.b16 %v90, %v89
    %v102 = vpack.c.b16 %v92, %v91
    %v103 = vpack.c.b16 %v94, %v93
    %v104 = vpack.c.b16 %v96, %v95
    %v105 = vpack.c.b16 %v97, %v97
    %vm113 = vcmask 982016
    %v115 = vsel %vm113, %v66, 0
    %vm117 = vcmask 1043456
    %v119 = vsel %vm117, %v105, 0
    %121 = vmatprep.subr.bf16.mxu0 0
    %122 = vmatpush1.bf16.msra.mxu0 %v98
    %123 = vmatprep.subr.bf16.mxu0 0
    %124 = vmatpush1.bf16.msra.mxu0 %v99
    %125 = vmatprep.subr.bf16.mxu0 0
    %126 = vmatpush1.bf16.msra.mxu0 %v100
    %127 = vmatprep.subr.bf16.mxu0 0
    %128 = vmatpush1.bf16.msra.mxu0 %v101
    %129 = vmatprep.subr.bf16.mxu0 0
    %130 = vmatpush1.bf16.msra.mxu0 %v102
    %131 = vmatprep.subr.bf16.mxu0 0
    %132 = vmatpush1.bf16.msra.mxu0 %v103
    %133 = vmatprep.subr.bf16.mxu0 0
    %134 = vmatpush1.bf16.msra.mxu0 %v104
    %135 = vmatprep.subr.bf16.mxu0 0
    %136 = vmatpush1.bf16.msra.mxu0 %v119
    %137 = vmatprep.subr.bf16.mxu0 0
    %138 = vmatpush1.bf16.msra.mxu0 0
    %139 = vmatprep.subr.bf16.mxu0 0
    %140 = vmatpush1.bf16.msra.mxu0 0
    %141 = vmatprep.subr.bf16.mxu0 0
    %142 = vmatpush1.bf16.msra.mxu0 0
    %143 = vmatprep.subr.bf16.mxu0 0
    %144 = vmatpush1.bf16.msra.mxu0 0
    %145 = vmatprep.subr.bf16.mxu0 0
    %146 = vmatpush1.bf16.msra.mxu0 0
    %147 = vmatprep.subr.bf16.mxu0 0
    %148 = vmatpush1.bf16.msra.mxu0 0
    %149 = vmatprep.subr.bf16.mxu0 0
    %150 = vmatpush1.bf16.msra.mxu0 0
    %151 = vmatprep.subr.bf16.mxu0 0
    %152 = vmatpush1.bf16.msra.mxu0 0
    %153 = vmatprep.mubr.bf16.mxu0 0
    %154 = vmatmul.mubr.bf16.gmra.mrb[0].mxu0 %v115
    %v155 = vpop.f32.mrb[0].mxu0
    %v156 = vadd.f32 %v67, %v155
    %v157 = vpop.f32.mrb[0].mxu0
    %v158 = vpop.f32.mrb[0].mxu0
    %v159 = vadd.f32 %v67, %v158
    %v160 = vpop.f32.mrb[0].mxu0
    %161 = vdwg.mxu0
    %vm162 = vcmask 261120
    %v163 = vsel %vm162, %v156, 0.0
    %164 = vadd.xlane.f32.xlu0 %v163
    %v165 = vpop.xlane.xlu0 %164
    %v166 = vsel %vm162, %v159, 0.0
    %167 = vadd.xlane.f32.xlu0 %v166
    %v168 = vpop.xlane.xlu0 %167
    %v169 = vrcp.pop 32.0
    %v170 = vmul.f32 %v165, %v169
    %v171 = vmul.f32 %v168, %v169
    %v172 = vsub.f32 %v156, %v170
    %v173 = vsub.f32 %v159, %v171
    %v174 = vmul.f32 %v172, %v172
    %v175 = vmul.f32 %v173, %v173
    %v176 = vsel %vm162, %v174, 0.0
    %177 = vadd.xlane.f32.xlu0 %v176
    %v178 = vpop.xlane.xlu0 %177
    %v179 = vsel %vm162, %v175, 0.0
    %180 = vadd.xlane.f32.xlu0 %v179
    %v181 = vpop.xlane.xlu0 %180
    %v182 = vmul.f32 %v178, %v169
    %v183 = vmul.f32 %v181, %v169
    %v184 = vadd.f32 %v182, 1e-12
    %v185 = vadd.f32 %v183, 1e-12
    %v186 = vrsqrt.pop %v184
    %v187 = vrsqrt.pop %v185
    %v188 = vmul.f32 %v172, %v186
    %v189 = vmul.f32 %v173, %v187
    %v190 = vlaneseq
    %v191 = vshrl.u32 %v190, 7
    %v192 = vsub.s32 6, %v191
    %v193 = vrot.slane %v34, %v192
    %v194 = vmul.f32 %v188, %v193
    %v195 = vmul.f32 %v189, %v193
    %197 = vrot.lane.b32.xlu0 %v193, 96
    %v198 = vpop.permute.xlu0 %197
    %v200 = vadd.f32 %v194, %v198
    %v201 = vadd.f32 %v195, %v198
    %v202 = vld [vmem:[#allocation2] sm:$0x1]
    %vm203 = vcmp.gt.f32.partialorder %v202, 0.5
    %vm204 = vcmp.ge.s32.totalorder %v53, 0
    %vm205 = vcmp.lt.s32.totalorder %v53, 8
    %vm206 = vmand %vm204, %vm205
    %v207 = vsel %vm203, 1, 0
    %v208 = vlaneseq
    %v209 = vshrl.u32 %v208, 7
    %v210 = vsub.s32 0, %v209
    %v211 = vrot.slane %v207, %v210
    %vm212 = vcmp.eq.s32.totalorder %v211, 1
    %vm213 = vmand %vm206, %vm212
    %v214 = vsel %vm213, 0.0, -1e+09
    %vm215 = vcmp.ge.s32.totalorder %v53, 8
    %vm216 = vcmp.lt.s32.totalorder %v53, 16
    %vm217 = vmand %vm215, %vm216
    %vm218 = vmand %vm217, %vm212
    %v219 = vsel %vm218, 0.0, -1e+09
    %v220 = vld [vmem:[%s3] sm:$0xff]
    %v221 = vld [vmem:[%s3 + $0x8] sm:$0xff]
    %v222 = vld [vmem:[%s3 + $0x10] sm:$0xff]
    %v223 = vld [vmem:[%s3 + $0x18] sm:$0xff]
    %v224 = vpack.c.bf16 %v201, %v200
    %v225 = vlaneseq
    %v226 = vshrl.u32 %v225, 7
    %v227 = vsub.s32 0, %v226
    %v228 = vrot.slane %v34, %v227
    %v233 = vunpack.c.l.b16 %v220
    %v234 = vunpack.c.l.b16 %v221
    %v235 = vunpack.c.l.b16 %v222
    %v236 = vunpack.c.l.b16 %v223
    %v237 = vpack.c.b16 %v234, %v233
    %v238 = vpack.c.b16 %v236, %v235
    %v242 = vsel %vm162, %v224, 0
    %244 = vmatprep.subr.bf16.mxu0 0
    %245 = vmatpush1.bf16.msra.mxu0 %v237
    %246 = vmatprep.subr.bf16.mxu0 0
    %247 = vmatpush1.bf16.msra.mxu0 %v238
    %248 = vmatprep.subr.bf16.mxu0 0
    %249 = vmatpush1.bf16.msra.mxu0 0
    %250 = vmatprep.subr.bf16.mxu0 0
    %251 = vmatpush1.bf16.msra.mxu0 0
    %252 = vmatprep.subr.bf16.mxu0 0
    %253 = vmatpush1.bf16.msra.mxu0 0
    %254 = vmatprep.subr.bf16.mxu0 0
    %255 = vmatpush1.bf16.msra.mxu0 0
    %256 = vmatprep.subr.bf16.mxu0 0
    %257 = vmatpush1.bf16.msra.mxu0 0
    %258 = vmatprep.subr.bf16.mxu0 0
    %259 = vmatpush1.bf16.msra.mxu0 0
    %260 = vmatprep.subr.bf16.mxu0 0
    %261 = vmatpush1.bf16.msra.mxu0 0
    %262 = vmatprep.subr.bf16.mxu0 0
    %263 = vmatpush1.bf16.msra.mxu0 0
    %264 = vmatprep.subr.bf16.mxu0 0
    %265 = vmatpush1.bf16.msra.mxu0 0
    %266 = vmatprep.subr.bf16.mxu0 0
    %267 = vmatpush1.bf16.msra.mxu0 0
    %268 = vmatprep.subr.bf16.mxu0 0
    %269 = vmatpush1.bf16.msra.mxu0 0
    %270 = vmatprep.subr.bf16.mxu0 0
    %271 = vmatpush1.bf16.msra.mxu0 0
    %272 = vmatprep.subr.bf16.mxu0 0
    %273 = vmatpush1.bf16.msra.mxu0 0
    %274 = vmatprep.subr.bf16.mxu0 0
    %275 = vmatpush1.bf16.msra.mxu0 0
    %276 = vmatprep.mubr.bf16.mxu0 0
    %277 = vmatmul.mubr.bf16.gmra.mrb[0].mxu0 %v242
    %v278 = vpop.f32.mrb[0].mxu0
    %v279 = vadd.f32 %v228, %v278
    %v280 = vpop.f32.mrb[0].mxu0
    %v281 = vpop.f32.mrb[0].mxu0
    %v282 = vadd.f32 %v228, %v281
    %v283 = vpop.f32.mrb[0].mxu0
    %284 = vdwg.mxu0
    %v285 = vpack.c.bf16 %v282, %v279
    %287 = vrot.lane.b32.xlu0 %v285, 96
    %v288 = vpop.permute.xlu0 %287
    %vm289 = vcmask 130048
    %v291 = vsel %vm289, %v285, 0
    %v294 = vsel %vm289, %v288, 0
    %296 = vmatprep.subr.bf16.mxu0 0
    %297 = vmatpush1.bf16.xpose.msra.mxu0 %v294
    %298 = vmatprep.subr.bf16.mxu0 0
    %299 = vmatpush1.bf16.xpose.msra.mxu0 0
    %300 = vmatprep.subr.bf16.mxu0 0
    %301 = vmatpush1.bf16.xpose.msra.mxu0 0
    %302 = vmatprep.subr.bf16.mxu0 0
    %303 = vmatpush1.bf16.xpose.msra.mxu0 0
    %304 = vmatprep.subr.bf16.mxu0 0
    %305 = vmatpush1.bf16.xpose.msra.mxu0 0
    %306 = vmatprep.subr.bf16.mxu0 0
    %307 = vmatpush1.bf16.xpose.msra.mxu0 0
    %308 = vmatprep.subr.bf16.mxu0 0
    %309 = vmatpush1.bf16.xpose.msra.mxu0 0
    %310 = vmatprep.subr.bf16.mxu0 0
    %311 = vmatpush1.bf16.xpose.msra.mxu0 0
    %312 = vmatprep.subr.bf16.mxu0 0
    %313 = vmatpush1.bf16.xpose.msra.mxu0 0
    %314 = vmatprep.subr.bf16.mxu0 0
    %315 = vmatpush1.bf16.xpose.msra.mxu0 0
    %316 = vmatprep.subr.bf16.mxu0 0
    %317 = vmatpush1.bf16.xpose.msra.mxu0 0
    %318 = vmatprep.subr.bf16.mxu0 0
    %319 = vmatpush1.bf16.xpose.msra.mxu0 0
    %320 = vmatprep.subr.bf16.mxu0 0
    %321 = vmatpush1.bf16.xpose.msra.mxu0 0
    %322 = vmatprep.subr.bf16.mxu0 0
    %323 = vmatpush1.bf16.xpose.msra.mxu0 0
    %324 = vmatprep.subr.bf16.mxu0 0
    %325 = vmatpush1.bf16.xpose.msra.mxu0 0
    %326 = vmatprep.subr.bf16.mxu0 0
    %327 = vmatpush1.bf16.xpose.msra.mxu0 0
    %328 = vmatprep.mubr.bf16.mxu0 0
    %329 = vmatmul.mubr.bf16.gmra.mrb[0].mxu0 %v291
    %v330 = vpop.f32.mrb[0].mxu0
    %v331 = vadd.f32 0.0, %v330
    %v332 = vpop.f32.mrb[0].mxu0
    %v333 = vpop.f32.mrb[0].mxu0
    %v334 = vadd.f32 0.0, %v333
    %v335 = vpop.f32.mrb[0].mxu0
    %336 = vdwg.mxu0
    %v337 = vmul.f32 %v331, 0.25
    %v338 = vmul.f32 %v334, 0.25
    %v339 = vadd.f32 %v337, %v214
    %v340 = vadd.f32 %v338, %v219
    %v341 = vsel %vm289, %v339, -inf
    %342 = vmax.xlane.f32.xlu0 %v341
    %v343 = vpop.xlane.xlu0 %342
    %v344 = vsel %vm289, %v340, -inf
    %345 = vmax.xlane.f32.xlu0 %v344
    %v346 = vpop.xlane.xlu0 %345
    %v347 = vsub.f32 %v339, %v343
    %v348 = vsub.f32 %v340, %v346
    %v349 = vmul.f32 %v347, 1.442695
    %v350 = vpow.pop %v349
    %v351 = vmul.f32 %v348, 1.442695
    %v352 = vpow.pop %v351
    %v353 = vsel %vm289, %v350, 0.0
    %354 = vadd.xlane.f32.xlu0 %v353
    %v355 = vpop.xlane.xlu0 %354
    %v356 = vsel %vm289, %v352, 0.0
    %357 = vadd.xlane.f32.xlu0 %v356
    %v358 = vpop.xlane.xlu0 %357
    %v359 = vrcp.pop %v355
    %v360 = vrcp.pop %v358
    %v361 = vmul.f32 %v350, %v359
    %v362 = vmul.f32 %v352, %v360
    %v363 = vpack.c.bf16 %v362, %v361
    %364 = vrot.lane.b32.xlu0 %v285, 64
    %v365 = vpop.permute.xlu0 %364
    %v368 = vsel %vm289, %v363, 0
    %370 = vmatprep.subr.bf16.mxu0 0
    %371 = vmatpush1.bf16.msra.mxu0 %v365
    %372 = vmatprep.subr.bf16.mxu0 0
    %373 = vmatpush1.bf16.msra.mxu0 0
    %374 = vmatprep.subr.bf16.mxu0 0
    %375 = vmatpush1.bf16.msra.mxu0 0
    %376 = vmatprep.subr.bf16.mxu0 0
    %377 = vmatpush1.bf16.msra.mxu0 0
    %378 = vmatprep.subr.bf16.mxu0 0
    %379 = vmatpush1.bf16.msra.mxu0 0
    %380 = vmatprep.subr.bf16.mxu0 0
    %381 = vmatpush1.bf16.msra.mxu0 0
    %382 = vmatprep.subr.bf16.mxu0 0
    %383 = vmatpush1.bf16.msra.mxu0 0
    %384 = vmatprep.subr.bf16.mxu0 0
    %385 = vmatpush1.bf16.msra.mxu0 0
    %386 = vmatprep.subr.bf16.mxu0 0
    %387 = vmatpush1.bf16.msra.mxu0 0
    %388 = vmatprep.subr.bf16.mxu0 0
    %389 = vmatpush1.bf16.msra.mxu0 0
    %390 = vmatprep.subr.bf16.mxu0 0
    %391 = vmatpush1.bf16.msra.mxu0 0
    %392 = vmatprep.subr.bf16.mxu0 0
    %393 = vmatpush1.bf16.msra.mxu0 0
    %394 = vmatprep.subr.bf16.mxu0 0
    %395 = vmatpush1.bf16.msra.mxu0 0
    %396 = vmatprep.subr.bf16.mxu0 0
    %397 = vmatpush1.bf16.msra.mxu0 0
    %398 = vmatprep.subr.bf16.mxu0 0
    %399 = vmatpush1.bf16.msra.mxu0 0
    %400 = vmatprep.subr.bf16.mxu0 0
    %401 = vmatpush1.bf16.msra.mxu0 0
    %402 = vmatprep.mubr.bf16.mxu0 0
    %403 = vmatmul.mubr.bf16.gmra.mrb[0].mxu0 %v368
    %v404 = vpop.f32.mrb[0].mxu0
    %v405 = vadd.f32 0.0, %v404
    %v406 = vpop.f32.mrb[0].mxu0
    %v407 = vpop.f32.mrb[0].mxu0
    %v408 = vadd.f32 0.0, %v407
    %v409 = vpop.f32.mrb[0].mxu0
    %410 = vdwg.mxu0
    %411 = vrot.lane.b32.xlu0 %v285, 112
    %v412 = vpop.permute.xlu0 %411
    %413 = vrot.lane.b32.xlu0 %v285, 80
    %v414 = vpop.permute.xlu0 %413
    %v416 = vsel %vm289, %v412, 0
    %v419 = vsel %vm289, %v414, 0
    %421 = vmatprep.subr.bf16.mxu0 0
    %422 = vmatpush1.bf16.xpose.msra.mxu0 %v419
    %423 = vmatprep.subr.bf16.mxu0 0
    %424 = vmatpush1.bf16.xpose.msra.mxu0 0
    %425 = vmatprep.subr.bf16.mxu0 0
    %426 = vmatpush1.bf16.xpose.msra.mxu0 0
    %427 = vmatprep.subr.bf16.mxu0 0
    %428 = vmatpush1.bf16.xpose.msra.mxu0 0
    %429 = vmatprep.subr.bf16.mxu0 0
    %430 = vmatpush1.bf16.xpose.msra.mxu0 0
    %431 = vmatprep.subr.bf16.mxu0 0
    %432 = vmatpush1.bf16.xpose.msra.mxu0 0
    %433 = vmatprep.subr.bf16.mxu0 0
    %434 = vmatpush1.bf16.xpose.msra.mxu0 0
    %435 = vmatprep.subr.bf16.mxu0 0
    %436 = vmatpush1.bf16.xpose.msra.mxu0 0
    %437 = vmatprep.subr.bf16.mxu0 0
    %438 = vmatpush1.bf16.xpose.msra.mxu0 0
    %439 = vmatprep.subr.bf16.mxu0 0
    %440 = vmatpush1.bf16.xpose.msra.mxu0 0
    %441 = vmatprep.subr.bf16.mxu0 0
    %442 = vmatpush1.bf16.xpose.msra.mxu0 0
    %443 = vmatprep.subr.bf16.mxu0 0
    %444 = vmatpush1.bf16.xpose.msra.mxu0 0
    %445 = vmatprep.subr.bf16.mxu0 0
    %446 = vmatpush1.bf16.xpose.msra.mxu0 0
    %447 = vmatprep.subr.bf16.mxu0 0
    %448 = vmatpush1.bf16.xpose.msra.mxu0 0
    %449 = vmatprep.subr.bf16.mxu0 0
    %450 = vmatpush1.bf16.xpose.msra.mxu0 0
    %451 = vmatprep.subr.bf16.mxu0 0
    %452 = vmatpush1.bf16.xpose.msra.mxu0 0
    %453 = vmatprep.mubr.bf16.mxu0 0
    %454 = vmatmul.mubr.bf16.gmra.mrb[0].mxu0 %v416
    %v455 = vpop.f32.mrb[0].mxu0
    %v456 = vadd.f32 0.0, %v455
    %v457 = vpop.f32.mrb[0].mxu0
    %v458 = vpop.f32.mrb[0].mxu0
    %v459 = vadd.f32 0.0, %v458
    %v460 = vpop.f32.mrb[0].mxu0
    %461 = vdwg.mxu0
    %v462 = vmul.f32 %v456, 0.25
    %v463 = vmul.f32 %v459, 0.25
    %v464 = vadd.f32 %v462, %v214
    %v465 = vadd.f32 %v463, %v219
    %v466 = vsel %vm289, %v464, -inf
    %467 = vmax.xlane.f32.xlu0 %v466
    %v468 = vpop.xlane.xlu0 %467
    %v469 = vsel %vm289, %v465, -inf
    %470 = vmax.xlane.f32.xlu0 %v469
    %v471 = vpop.xlane.xlu0 %470
    %v472 = vsub.f32 %v464, %v468
    %v473 = vsub.f32 %v465, %v471
    %v474 = vmul.f32 %v472, 1.442695
    %v475 = vpow.pop %v474
    %v476 = vmul.f32 %v473, 1.442695
    %v477 = vpow.pop %v476
    %v478 = vsel %vm289, %v475, 0.0
    %479 = vadd.xlane.f32.xlu0 %v478
    %v480 = vpop.xlane.xlu0 %479
    %v481 = vsel %vm289, %v477, 0.0
    %482 = vadd.xlane.f32.xlu0 %v481
    %v483 = vpop.xlane.xlu0 %482
    %v484 = vrcp.pop %v480
    %v485 = vrcp.pop %v483
    %v486 = vmul.f32 %v475, %v484
    %v487 = vmul.f32 %v477, %v485
    %v488 = vpack.c.bf16 %v487, %v486
    %489 = vrot.lane.b32.xlu0 %v285, 48
    %v490 = vpop.permute.xlu0 %489
    %v493 = vsel %vm289, %v488, 0
    %495 = vmatprep.subr.bf16.mxu0 0
    %496 = vmatpush1.bf16.msra.mxu0 %v490
    %497 = vmatprep.subr.bf16.mxu0 0
    %498 = vmatpush1.bf16.msra.mxu0 0
    %499 = vmatprep.subr.bf16.mxu0 0
    %500 = vmatpush1.bf16.msra.mxu0 0
    %501 = vmatprep.subr.bf16.mxu0 0
    %502 = vmatpush1.bf16.msra.mxu0 0
    %503 = vmatprep.subr.bf16.mxu0 0
    %504 = vmatpush1.bf16.msra.mxu0 0
    %505 = vmatprep.subr.bf16.mxu0 0
    %506 = vmatpush1.bf16.msra.mxu0 0
    %507 = vmatprep.subr.bf16.mxu0 0
    %508 = vmatpush1.bf16.msra.mxu0 0
    %509 = vmatprep.subr.bf16.mxu0 0
    %510 = vmatpush1.bf16.msra.mxu0 0
    %511 = vmatprep.subr.bf16.mxu0 0
    %512 = vmatpush1.bf16.msra.mxu0 0
    %513 = vmatprep.subr.bf16.mxu0 0
    %514 = vmatpush1.bf16.msra.mxu0 0
    %515 = vmatprep.subr.bf16.mxu0 0
    %516 = vmatpush1.bf16.msra.mxu0 0
    %517 = vmatprep.subr.bf16.mxu0 0
    %518 = vmatpush1.bf16.msra.mxu0 0
    %519 = vmatprep.subr.bf16.mxu0 0
    %520 = vmatpush1.bf16.msra.mxu0 0
    %521 = vmatprep.subr.bf16.mxu0 0
    %522 = vmatpush1.bf16.msra.mxu0 0
    %523 = vmatprep.subr.bf16.mxu0 0
    %524 = vmatpush1.bf16.msra.mxu0 0
    %525 = vmatprep.subr.bf16.mxu0 0
    %526 = vmatpush1.bf16.msra.mxu0 0
    %527 = vmatprep.mubr.bf16.mxu0 0
    %528 = vmatmul.mubr.bf16.gmra.mrb[0].mxu0 %v493
    %v529 = vpop.f32.mrb[0].mxu0
    %v530 = vadd.f32 0.0, %v529
    %v531 = vpop.f32.mrb[0].mxu0
    %v532 = vpop.f32.mrb[0].mxu0
    %v533 = vadd.f32 0.0, %v532
    %v534 = vpop.f32.mrb[0].mxu0
    %535 = vdwg.mxu0
    %538 = vrot.lane.b32.xlu0 %v530, 16
    %v539 = vpop.permute.xlu0 %538
    %540 = vrot.lane.b32.xlu0 %v533, 16
    %v541 = vpop.permute.xlu0 %540
    %v544 = vsel %vm289, %v405, %v539
    %v545 = vsel %vm289, %v408, %v541
    %v546 = vpack.c.bf16 %v545, %v544
    %547 = vrot.lane.b32.xlu0 %v237, 32
    %v548 = vpop.permute.xlu0 %547
    %549 = vrot.lane.b32.xlu0 %v238, 32
    %v550 = vpop.permute.xlu0 %549
    %554 = vrot.lane.b32.xlu0 %v228, 32
    %v555 = vpop.permute.xlu0 %554
    %v558 = vsel %vm162, %v546, 0
    %560 = vmatprep.subr.bf16.mxu0 0
    %561 = vmatpush1.bf16.msra.mxu0 %v548
    %562 = vmatprep.subr.bf16.mxu0 0
    %563 = vmatpush1.bf16.msra.mxu0 %v550
    %564 = vmatprep.subr.bf16.mxu0 0
    %565 = vmatpush1.bf16.msra.mxu0 0
    %566 = vmatprep.subr.bf16.mxu0 0
    %567 = vmatpush1.bf16.msra.mxu0 0
    %568 = vmatprep.subr.bf16.mxu0 0
    %569 = vmatpush1.bf16.msra.mxu0 0
    %570 = vmatprep.subr.bf16.mxu0 0
    %571 = vmatpush1.bf16.msra.mxu0 0
    %572 = vmatprep.subr.bf16.mxu0 0
    %573 = vmatpush1.bf16.msra.mxu0 0
    %574 = vmatprep.subr.bf16.mxu0 0
    %575 = vmatpush1.bf16.msra.mxu0 0
    %576 = vmatprep.subr.bf16.mxu0 0
    %577 = vmatpush1.bf16.msra.mxu0 0
    %578 = vmatprep.subr.bf16.mxu0 0
    %579 = vmatpush1.bf16.msra.mxu0 0
    %580 = vmatprep.subr.bf16.mxu0 0
    %581 = vmatpush1.bf16.msra.mxu0 0
    %582 = vmatprep.subr.bf16.mxu0 0
    %583 = vmatpush1.bf16.msra.mxu0 0
    %584 = vmatprep.subr.bf16.mxu0 0
    %585 = vmatpush1.bf16.msra.mxu0 0
    %586 = vmatprep.subr.bf16.mxu0 0
    %587 = vmatpush1.bf16.msra.mxu0 0
    %588 = vmatprep.subr.bf16.mxu0 0
    %589 = vmatpush1.bf16.msra.mxu0 0
    %590 = vmatprep.subr.bf16.mxu0 0
    %591 = vmatpush1.bf16.msra.mxu0 0
    %592 = vmatprep.mubr.bf16.mxu0 0
    %593 = vmatmul.mubr.bf16.gmra.mrb[0].mxu0 %v558
    %v594 = vpop.f32.mrb[0].mxu0
    %v595 = vadd.f32 %v555, %v594
    %v596 = vpop.f32.mrb[0].mxu0
    %v597 = vpop.f32.mrb[0].mxu0
    %v598 = vadd.f32 %v555, %v597
    %v599 = vpop.f32.mrb[0].mxu0
    %600 = vdwg.mxu0
    %v601 = vadd.f32 %v595, %v200
    %v602 = vadd.f32 %v598, %v201
    %v603 = vsel %vm162, %v601, 0.0
    %604 = vadd.xlane.f32.xlu0 %v603
    %v605 = vpop.xlane.xlu0 %604
    %v606 = vsel %vm162, %v602, 0.0
    %607 = vadd.xlane.f32.xlu0 %v606
    %v608 = vpop.xlane.xlu0 %607
    %v609 = vmul.f32 %v605, %v169
    %v610 = vmul.f32 %v608, %v169
    %v611 = vsub.f32 %v601, %v609
    %v612 = vsub.f32 %v602, %v610
    %v613 = vmul.f32 %v611, %v611
    %v614 = vmul.f32 %v612, %v612
    %v615 = vsel %vm162, %v613, 0.0
    %616 = vadd.xlane.f32.xlu0 %v615
    %v617 = vpop.xlane.xlu0 %616
    %v618 = vsel %vm162, %v614, 0.0
    %619 = vadd.xlane.f32.xlu0 %v618
    %v620 = vpop.xlane.xlu0 %619
    %v621 = vmul.f32 %v617, %v169
    %v622 = vmul.f32 %v620, %v169
    %v623 = vadd.f32 %v621, 1e-12
    %v624 = vadd.f32 %v622, 1e-12
    %v625 = vrsqrt.pop %v623
    %v626 = vrsqrt.pop %v624
    %v627 = vmul.f32 %v611, %v625
    %v628 = vmul.f32 %v612, %v626
    %v629 = vlaneseq
    %v630 = vshrl.u32 %v629, 7
    %v631 = vsub.s32 1, %v630
    %v632 = vrot.slane %v34, %v631
    %v633 = vmul.f32 %v627, %v632
    %v634 = vmul.f32 %v628, %v632
    %636 = vrot.lane.b32.xlu0 %v632, 96
    %v637 = vpop.permute.xlu0 %636
    %v639 = vadd.f32 %v633, %v637
    %v640 = vadd.f32 %v634, %v637
    %v641 = vpack.c.bf16 %v640, %v639
    %v642 = vlaneseq
    %v643 = vshrl.u32 %v642, 7
    %v644 = vsub.s32 2, %v643
    %v645 = vrot.slane %v34, %v644
    %v646 = vunpack.c.h.b16 %v220
    %v647 = vunpack.c.h.b16 %v221
    %v648 = vunpack.c.h.b16 %v222
    %v649 = vunpack.c.h.b16 %v223
    %v650 = vpack.c.b16 %v647, %v646
    %v651 = vpack.c.b16 %v649, %v648
    %v655 = vsel %vm162, %v641, 0
    %657 = vmatprep.subr.bf16.mxu0 0
    %658 = vmatpush1.bf16.msra.mxu0 %v650
    %659 = vmatprep.subr.bf16.mxu0 0
    %660 = vmatpush1.bf16.msra.mxu0 %v651
    %661 = vmatprep.subr.bf16.mxu0 0
    %662 = vmatpush1.bf16.msra.mxu0 0
    %663 = vmatprep.subr.bf16.mxu0 0
    %664 = vmatpush1.bf16.msra.mxu0 0
    %665 = vmatprep.subr.bf16.mxu0 0
    %666 = vmatpush1.bf16.msra.mxu0 0
    %667 = vmatprep.subr.bf16.mxu0 0
    %668 = vmatpush1.bf16.msra.mxu0 0
    %669 = vmatprep.subr.bf16.mxu0 0
    %670 = vmatpush1.bf16.msra.mxu0 0
    %671 = vmatprep.subr.bf16.mxu0 0
    %672 = vmatpush1.bf16.msra.mxu0 0
    %673 = vmatprep.subr.bf16.mxu0 0
    %674 = vmatpush1.bf16.msra.mxu0 0
    %675 = vmatprep.subr.bf16.mxu0 0
    %676 = vmatpush1.bf16.msra.mxu0 0
    %677 = vmatprep.subr.bf16.mxu0 0
    %678 = vmatpush1.bf16.msra.mxu0 0
    %679 = vmatprep.subr.bf16.mxu0 0
    %680 = vmatpush1.bf16.msra.mxu0 0
    %681 = vmatprep.subr.bf16.mxu0 0
    %682 = vmatpush1.bf16.msra.mxu0 0
    %683 = vmatprep.subr.bf16.mxu0 0
    %684 = vmatpush1.bf16.msra.mxu0 0
    %685 = vmatprep.subr.bf16.mxu0 0
    %686 = vmatpush1.bf16.msra.mxu0 0
    %687 = vmatprep.subr.bf16.mxu0 0
    %688 = vmatpush1.bf16.msra.mxu0 0
    %689 = vmatprep.mubr.bf16.mxu0 0
    %690 = vmatmul.mubr.bf16.gmra.mrb[0].mxu0 %v655
    %v691 = vpop.f32.mrb[0].mxu0
    %v692 = vadd.f32 %v645, %v691
    %v693 = vpop.f32.mrb[0].mxu0
    %v694 = vpop.f32.mrb[0].mxu0
    %v695 = vadd.f32 %v645, %v694
    %v696 = vpop.f32.mrb[0].mxu0
    %697 = vdwg.mxu0
    %v698 = vmul.f32 %v692, 0.5
    %v699 = vmul.f32 %v695, 0.5
    %v700 = vmul.f32 %v692, 0.044715
    %v701 = vmul.f32 %v695, 0.044715
    %v702 = vmul.f32 %v700, %v692
    %v703 = vmul.f32 %v701, %v695
    %v704 = vmul.f32 %v702, %v692
    %v705 = vmul.f32 %v703, %v695
    %v706 = vadd.f32 %v692, %v704
    %v707 = vadd.f32 %v695, %v705
    %v708 = vmul.f32 %v706, 0.7978846
    %v709 = vmul.f32 %v707, 0.7978846
    %v710 = vtanh.pop %v708
    %v711 = vtanh.pop %v709
    %v712 = vadd.f32 %v710, 1.0
    %v713 = vadd.f32 %v711, 1.0
    %v714 = vmul.f32 %v698, %v712
    %v715 = vmul.f32 %v699, %v713
    %v716 = vpack.c.bf16 %v715, %v714
    %717 = vrot.lane.b32.xlu0 %v650, 64
    %v718 = vpop.permute.xlu0 %717
    %719 = vrot.lane.b32.xlu0 %v651, 64
    %v720 = vpop.permute.xlu0 %719
    %722 = vrot.lane.b32.xlu0 %v645, 64
    %v723 = vpop.permute.xlu0 %722
    %vm725 = vcmask 523264
    %v727 = vsel %vm725, %v716, 0
    %v730 = vsel %vm725, %v718, 0
    %v733 = vsel %vm725, %v720, 0
    %735 = vmatprep.subr.bf16.mxu0 0
    %736 = vmatpush1.bf16.xpose.msra.mxu0 %v730
    %737 = vmatprep.subr.bf16.mxu0 0
    %738 = vmatpush1.bf16.xpose.msra.mxu0 %v733
    %739 = vmatprep.subr.bf16.mxu0 0
    %740 = vmatpush1.bf16.xpose.msra.mxu0 0
    %741 = vmatprep.subr.bf16.mxu0 0
    %742 = vmatpush1.bf16.xpose.msra.mxu0 0
    %743 = vmatprep.subr.bf16.mxu0 0
    %744 = vmatpush1.bf16.xpose.msra.mxu0 0
    %745 = vmatprep.subr.bf16.mxu0 0
    %746 = vmatpush1.bf16.xpose.msra.mxu0 0
    %747 = vmatprep.subr.bf16.mxu0 0
    %748 = vmatpush1.bf16.xpose.msra.mxu0 0
    %749 = vmatprep.subr.bf16.mxu0 0
    %750 = vmatpush1.bf16.xpose.msra.mxu0 0
    %751 = vmatprep.subr.bf16.mxu0 0
    %752 = vmatpush1.bf16.xpose.msra.mxu0 0
    %753 = vmatprep.subr.bf16.mxu0 0
    %754 = vmatpush1.bf16.xpose.msra.mxu0 0
    %755 = vmatprep.subr.bf16.mxu0 0
    %756 = vmatpush1.bf16.xpose.msra.mxu0 0
    %757 = vmatprep.subr.bf16.mxu0 0
    %758 = vmatpush1.bf16.xpose.msra.mxu0 0
    %759 = vmatprep.subr.bf16.mxu0 0
    %760 = vmatpush1.bf16.xpose.msra.mxu0 0
    %761 = vmatprep.subr.bf16.mxu0 0
    %762 = vmatpush1.bf16.xpose.msra.mxu0 0
    %763 = vmatprep.subr.bf16.mxu0 0
    %764 = vmatpush1.bf16.xpose.msra.mxu0 0
    %765 = vmatprep.subr.bf16.mxu0 0
    %766 = vmatpush1.bf16.xpose.msra.mxu0 0
    %767 = vmatprep.mubr.bf16.mxu0 0
    %768 = vmatmul.mubr.bf16.gmra.mrb[0].mxu0 %v727
    %v769 = vpop.f32.mrb[0].mxu0
    %v770 = vadd.f32 %v723, %v769
    %v771 = vpop.f32.mrb[0].mxu0
    %v772 = vpop.f32.mrb[0].mxu0
    %v773 = vadd.f32 %v723, %v772
    %v774 = vpop.f32.mrb[0].mxu0
    %775 = vdwg.mxu0
    %v776 = vadd.f32 %v770, %v639
    %v777 = vadd.f32 %v773, %v640
    %v778 = vsel %vm162, %v776, 0.0
    %779 = vadd.xlane.f32.xlu0 %v778
    %v780 = vpop.xlane.xlu0 %779
    %v781 = vsel %vm162, %v777, 0.0
    %782 = vadd.xlane.f32.xlu0 %v781
    %v783 = vpop.xlane.xlu0 %782
    %v784 = vmul.f32 %v780, %v169
    %v785 = vmul.f32 %v783, %v169
    %v786 = vsub.f32 %v776, %v784
    %v787 = vsub.f32 %v777, %v785
    %v788 = vmul.f32 %v786, %v786
    %v789 = vmul.f32 %v787, %v787
    %v790 = vsel %vm162, %v788, 0.0
    %791 = vadd.xlane.f32.xlu0 %v790
    %v792 = vpop.xlane.xlu0 %791
    %v793 = vsel %vm162, %v789, 0.0
    %794 = vadd.xlane.f32.xlu0 %v793
    %v795 = vpop.xlane.xlu0 %794
    %v796 = vmul.f32 %v792, %v169
    %v797 = vmul.f32 %v795, %v169
    %v798 = vadd.f32 %v796, 1e-12
    %v799 = vadd.f32 %v797, 1e-12
    %v800 = vrsqrt.pop %v798
    %v801 = vrsqrt.pop %v799
    %v802 = vmul.f32 %v786, %v800
    %v803 = vmul.f32 %v787, %v801
    %804 = vrot.lane.b32.xlu0 %v632, 64
    %v805 = vpop.permute.xlu0 %804
    %v807 = vmul.f32 %v802, %v805
    %v808 = vmul.f32 %v803, %v805
    %809 = vrot.lane.b32.xlu0 %v632, 32
    %v810 = vpop.permute.xlu0 %809
    %v812 = vadd.f32 %v807, %v810
    %v813 = vadd.f32 %v808, %v810
    %s814 = scalar_lea.vmem %s3, 32
    %v815 = vld [vmem:[%s814] sm:$0xff]
    %v816 = vld [vmem:[%s814 + $0x8] sm:$0xff]
    %v817 = vld [vmem:[%s814 + $0x10] sm:$0xff]
    %v818 = vld [vmem:[%s814 + $0x18] sm:$0xff]
    %v819 = vpack.c.bf16 %v813, %v812
    %v820 = vlaneseq
    %v821 = vshrl.u32 %v820, 7
    %v822 = vsub.s32 3, %v821
    %v823 = vrot.slane %v34, %v822
    %v828 = vunpack.c.l.b16 %v815
    %v829 = vunpack.c.l.b16 %v816
    %v830 = vunpack.c.l.b16 %v817
    %v831 = vunpack.c.l.b16 %v818
    %v832 = vpack.c.b16 %v829, %v828
    %v833 = vpack.c.b16 %v831, %v830
    %v837 = vsel %vm162, %v819, 0
    %839 = vmatprep.subr.bf16.mxu0 0
    %840 = vmatpush1.bf16.msra.mxu0 %v832
    %841 = vmatprep.subr.bf16.mxu0 0
    %842 = vmatpush1.bf16.msra.mxu0 %v833
    %843 = vmatprep.subr.bf16.mxu0 0
    %844 = vmatpush1.bf16.msra.mxu0 0
    %845 = vmatprep.subr.bf16.mxu0 0
    %846 = vmatpush1.bf16.msra.mxu0 0
    %847 = vmatprep.subr.bf16.mxu0 0
    %848 = vmatpush1.bf16.msra.mxu0 0
    %849 = vmatprep.subr.bf16.mxu0 0
    %850 = vmatpush1.bf16.msra.mxu0 0
    %851 = vmatprep.subr.bf16.mxu0 0
    %852 = vmatpush1.bf16.msra.mxu0 0
    %853 = vmatprep.subr.bf16.mxu0 0
    %854 = vmatpush1.bf16.msra.mxu0 0
    %855 = vmatprep.subr.bf16.mxu0 0
    %856 = vmatpush1.bf16.msra.mxu0 0
    %857 = vmatprep.subr.bf16.mxu0 0
    %858 = vmatpush1.bf16.msra.mxu0 0
    %859 = vmatprep.subr.bf16.mxu0 0
    %860 = vmatpush1.bf16.msra.mxu0 0
    %861 = vmatprep.subr.bf16.mxu0 0
    %862 = vmatpush1.bf16.msra.mxu0 0
    %863 = vmatprep.subr.bf16.mxu0 0
    %864 = vmatpush1.bf16.msra.mxu0 0
    %865 = vmatprep.subr.bf16.mxu0 0
    %866 = vmatpush1.bf16.msra.mxu0 0
    %867 = vmatprep.subr.bf16.mxu0 0
    %868 = vmatpush1.bf16.msra.mxu0 0
    %869 = vmatprep.subr.bf16.mxu0 0
    %870 = vmatpush1.bf16.msra.mxu0 0
    %871 = vmatprep.mubr.bf16.mxu0 0
    %872 = vmatmul.mubr.bf16.gmra.mrb[0].mxu0 %v837
    %v873 = vpop.f32.mrb[0].mxu0
    %v874 = vadd.f32 %v823, %v873
    %v875 = vpop.f32.mrb[0].mxu0
    %v876 = vpop.f32.mrb[0].mxu0
    %v877 = vadd.f32 %v823, %v876
    %v878 = vpop.f32.mrb[0].mxu0
    %879 = vdwg.mxu0
    %v880 = vpack.c.bf16 %v877, %v874
    %882 = vrot.lane.b32.xlu0 %v880, 96
    %v883 = vpop.permute.xlu0 %882
    %v885 = vsel %vm289, %v880, 0
    %v888 = vsel %vm289, %v883, 0
    %890 = vmatprep.subr.bf16.mxu0 0
    %891 = vmatpush1.bf16.xpose.msra.mxu0 %v888
    %892 = vmatprep.subr.bf16.mxu0 0
    %893 = vmatpush1.bf16.xpose.msra.mxu0 0
    %894 = vmatprep.subr.bf16.mxu0 0
    %895 = vmatpush1.bf16.xpose.msra.mxu0 0
    %896 = vmatprep.subr.bf16.mxu0 0
    %897 = vmatpush1.bf16.xpose.msra.mxu0 0
    %898 = vmatprep.subr.bf16.mxu0 0
    %899 = vmatpush1.bf16.xpose.msra.mxu0 0
    %900 = vmatprep.subr.bf16.mxu0 0
    %901 = vmatpush1.bf16.xpose.msra.mxu0 0
    %902 = vmatprep.subr.bf16.mxu0 0
    %903 = vmatpush1.bf16.xpose.msra.mxu0 0
    %904 = vmatprep.subr.bf16.mxu0 0
    %905 = vmatpush1.bf16.xpose.msra.mxu0 0
    %906 = vmatprep.subr.bf16.mxu0 0
    %907 = vmatpush1.bf16.xpose.msra.mxu0 0
    %908 = vmatprep.subr.bf16.mxu0 0
    %909 = vmatpush1.bf16.xpose.msra.mxu0 0
    %910 = vmatprep.subr.bf16.mxu0 0
    %911 = vmatpush1.bf16.xpose.msra.mxu0 0
    %912 = vmatprep.subr.bf16.mxu0 0
    %913 = vmatpush1.bf16.xpose.msra.mxu0 0
    %914 = vmatprep.subr.bf16.mxu0 0
    %915 = vmatpush1.bf16.xpose.msra.mxu0 0
    %916 = vmatprep.subr.bf16.mxu0 0
    %917 = vmatpush1.bf16.xpose.msra.mxu0 0
    %918 = vmatprep.subr.bf16.mxu0 0
    %919 = vmatpush1.bf16.xpose.msra.mxu0 0
    %920 = vmatprep.subr.bf16.mxu0 0
    %921 = vmatpush1.bf16.xpose.msra.mxu0 0
    %922 = vmatprep.mubr.bf16.mxu0 0
    %923 = vmatmul.mubr.bf16.gmra.mrb[0].mxu0 %v885
    %v924 = vpop.f32.mrb[0].mxu0
    %v925 = vadd.f32 0.0, %v924
    %v926 = vpop.f32.mrb[0].mxu0
    %v927 = vpop.f32.mrb[0].mxu0
    %v928 = vadd.f32 0.0, %v927
    %v929 = vpop.f32.mrb[0].mxu0
    %930 = vdwg.mxu0
    %v931 = vmul.f32 %v925, 0.25
    %v932 = vmul.f32 %v928, 0.25
    %v933 = vadd.f32 %v931, %v214
    %v934 = vadd.f32 %v932, %v219
    %v935 = vsel %vm289, %v933, -inf
    %936 = vmax.xlane.f32.xlu0 %v935
    %v937 = vpop.xlane.xlu0 %936
    %v938 = vsel %vm289, %v934, -inf
    %939 = vmax.xlane.f32.xlu0 %v938
    %v940 = vpop.xlane.xlu0 %939
    %v941 = vsub.f32 %v933, %v937
    %v942 = vsub.f32 %v934, %v940
    %v943 = vmul.f32 %v941, 1.442695
    %v944 = vpow.pop %v943
    %v945 = vmul.f32 %v942, 1.442695
    %v946 = vpow.pop %v945
    %v947 = vsel %vm289, %v944, 0.0
    %948 = vadd.xlane.f32.xlu0 %v947
    %v949 = vpop.xlane.xlu0 %948
    %v950 = vsel %vm289, %v946, 0.0
    %951 = vadd.xlane.f32.xlu0 %v950
    %v952 = vpop.xlane.xlu0 %951
    %v953 = vrcp.pop %v949
    %v954 = vrcp.pop %v952
    %v955 = vmul.f32 %v944, %v953
    %v956 = vmul.f32 %v946, %v954
    %v957 = vpack.c.bf16 %v956, %v955
    %958 = vrot.lane.b32.xlu0 %v880, 64
    %v959 = vpop.permute.xlu0 %958
    %v962 = vsel %vm289, %v957, 0
    %964 = vmatprep.subr.bf16.mxu0 0
    %965 = vmatpush1.bf16.msra.mxu0 %v959
    %966 = vmatprep.subr.bf16.mxu0 0
    %967 = vmatpush1.bf16.msra.mxu0 0
    %968 = vmatprep.subr.bf16.mxu0 0
    %969 = vmatpush1.bf16.msra.mxu0 0
    %970 = vmatprep.subr.bf16.mxu0 0
    %971 = vmatpush1.bf16.msra.mxu0 0
    %972 = vmatprep.subr.bf16.mxu0 0
    %973 = vmatpush1.bf16.msra.mxu0 0
    %974 = vmatprep.subr.bf16.mxu0 0
    %975 = vmatpush1.bf16.msra.mxu0 0
    %976 = vmatprep.subr.bf16.mxu0 0
    %977 = vmatpush1.bf16.msra.mxu0 0
    %978 = vmatprep.subr.bf16.mxu0 0
    %979 = vmatpush1.bf16.msra.mxu0 0
    %980 = vmatprep.subr.bf16.mxu0 0
    %981 = vmatpush1.bf16.msra.mxu0 0
    %982 = vmatprep.subr.bf16.mxu0 0
    %983 = vmatpush1.bf16.msra.mxu0 0
    %984 = vmatprep.subr.bf16.mxu0 0
    %985 = vmatpush1.bf16.msra.mxu0 0
    %986 = vmatprep.subr.bf16.mxu0 0
    %987 = vmatpush1.bf16.msra.mxu0 0
    %988 = vmatprep.subr.bf16.mxu0 0
    %989 = vmatpush1.bf16.msra.mxu0 0
    %990 = vmatprep.subr.bf16.mxu0 0
    %991 = vmatpush1.bf16.msra.mxu0 0
    %992 = vmatprep.subr.bf16.mxu0 0
    %993 = vmatpush1.bf16.msra.mxu0 0
    %994 = vmatprep.subr.bf16.mxu0 0
    %995 = vmatpush1.bf16.msra.mxu0 0
    %996 = vmatprep.mubr.bf16.mxu0 0
    %997 = vmatmul.mubr.bf16.gmra.mrb[0].mxu0 %v962
    %v998 = vpop.f32.mrb[0].mxu0
    %v999 = vadd.f32 0.0, %v998
    %v1000 = vpop.f32.mrb[0].mxu0
    %v1001 = vpop.f32.mrb[0].mxu0
    %v1002 = vadd.f32 0.0, %v1001
    %v1003 = vpop.f32.mrb[0].mxu0
    %1004 = vdwg.mxu0
    %1005 = vrot.lane.b32.xlu0 %v880, 112
    %v1006 = vpop.permute.xlu0 %1005
    %1007 = vrot.lane.b32.xlu0 %v880, 80
    %v1008 = vpop.permute.xlu0 %1007
    %v1010 = vsel %vm289, %v1006, 0
    %v1013 = vsel %vm289, %v1008, 0
    %1015 = vmatprep.subr.bf16.mxu0 0
    %1016 = vmatpush1.bf16.xpose.msra.mxu0 %v1013
    %1017 = vmatprep.subr.bf16.mxu0 0
    %1018 = vmatpush1.bf16.xpose.msra.mxu0 0
    %1019 = vmatprep.subr.bf16.mxu0 0
    %1020 = vmatpush1.bf16.xpose.msra.mxu0 0
    %1021 = vmatprep.subr.bf16.mxu0 0
    %1022 = vmatpush1.bf16.xpose.msra.mxu0 0
    %1023 = vmatprep.subr.bf16.mxu0 0
    %1024 = vmatpush1.bf16.xpose.msra.mxu0 0
    %1025 = vmatprep.subr.bf16.mxu0 0
    %1026 = vmatpush1.bf16.xpose.msra.mxu0 0
    %1027 = vmatprep.subr.bf16.mxu0 0
    %1028 = vmatpush1.bf16.xpose.msra.mxu0 0
    %1029 = vmatprep.subr.bf16.mxu0 0
    %1030 = vmatpush1.bf16.xpose.msra.mxu0 0
    %1031 = vmatprep.subr.bf16.mxu0 0
    %1032 = vmatpush1.bf16.xpose.msra.mxu0 0
    %1033 = vmatprep.subr.bf16.mxu0 0
    %1034 = vmatpush1.bf16.xpose.msra.mxu0 0
    %1035 = vmatprep.subr.bf16.mxu0 0
    %1036 = vmatpush1.bf16.xpose.msra.mxu0 0
    %1037 = vmatprep.subr.bf16.mxu0 0
    %1038 = vmatpush1.bf16.xpose.msra.mxu0 0
    %1039 = vmatprep.subr.bf16.mxu0 0
    %1040 = vmatpush1.bf16.xpose.msra.mxu0 0
    %1041 = vmatprep.subr.bf16.mxu0 0
    %1042 = vmatpush1.bf16.xpose.msra.mxu0 0
    %1043 = vmatprep.subr.bf16.mxu0 0
    %1044 = vmatpush1.bf16.xpose.msra.mxu0 0
    %1045 = vmatprep.subr.bf16.mxu0 0
    %1046 = vmatpush1.bf16.xpose.msra.mxu0 0
    %1047 = vmatprep.mubr.bf16.mxu0 0
    %1048 = vmatmul.mubr.bf16.gmra.mrb[0].mxu0 %v1010
    %v1049 = vpop.f32.mrb[0].mxu0
    %v1050 = vadd.f32 0.0, %v1049
    %v1051 = vpop.f32.mrb[0].mxu0
    %v1052 = vpop.f32.mrb[0].mxu0
    %v1053 = vadd.f32 0.0, %v1052
    %v1054 = vpop.f32.mrb[0].mxu0
    %1055 = vdwg.mxu0
    %v1056 = vmul.f32 %v1050, 0.25
    %v1057 = vmul.f32 %v1053, 0.25
    %v1058 = vadd.f32 %v1056, %v214
    %v1059 = vadd.f32 %v1057, %v219
    %v1060 = vsel %vm289, %v1058, -inf
    %1061 = vmax.xlane.f32.xlu0 %v1060
    %v1062 = vpop.xlane.xlu0 %1061
    %v1063 = vsel %vm289, %v1059, -inf
    %1064 = vmax.xlane.f32.xlu0 %v1063
    %v1065 = vpop.xlane.xlu0 %1064
    %v1066 = vsub.f32 %v1058, %v1062
    %v1067 = vsub.f32 %v1059, %v1065
    %v1068 = vmul.f32 %v1066, 1.442695
    %v1069 = vpow.pop %v1068
    %v1070 = vmul.f32 %v1067, 1.442695
    %v1071 = vpow.pop %v1070
    %v1072 = vsel %vm289, %v1069, 0.0
    %1073 = vadd.xlane.f32.xlu0 %v1072
    %v1074 = vpop.xlane.xlu0 %1073
    %v1075 = vsel %vm289, %v1071, 0.0
    %1076 = vadd.xlane.f32.xlu0 %v1075
    %v1077 = vpop.xlane.xlu0 %1076
    %v1078 = vrcp.pop %v1074
    %v1079 = vrcp.pop %v1077
    %v1080 = vmul.f32 %v1069, %v1078
    %v1081 = vmul.f32 %v1071, %v1079
    %v1082 = vpack.c.bf16 %v1081, %v1080
    %1083 = vrot.lane.b32.xlu0 %v880, 48
    %v1084 = vpop.permute.xlu0 %1083
    %v1087 = vsel %vm289, %v1082, 0
    %1089 = vmatprep.subr.bf16.mxu0 0
    %1090 = vmatpush1.bf16.msra.mxu0 %v1084
    %1091 = vmatprep.subr.bf16.mxu0 0
    %1092 = vmatpush1.bf16.msra.mxu0 0
    %1093 = vmatprep.subr.bf16.mxu0 0
    %1094 = vmatpush1.bf16.msra.mxu0 0
    %1095 = vmatprep.subr.bf16.mxu0 0
    %1096 = vmatpush1.bf16.msra.mxu0 0
    %1097 = vmatprep.subr.bf16.mxu0 0
    %1098 = vmatpush1.bf16.msra.mxu0 0
    %1099 = vmatprep.subr.bf16.mxu0 0
    %1100 = vmatpush1.bf16.msra.mxu0 0
    %1101 = vmatprep.subr.bf16.mxu0 0
    %1102 = vmatpush1.bf16.msra.mxu0 0
    %1103 = vmatprep.subr.bf16.mxu0 0
    %1104 = vmatpush1.bf16.msra.mxu0 0
    %1105 = vmatprep.subr.bf16.mxu0 0
    %1106 = vmatpush1.bf16.msra.mxu0 0
    %1107 = vmatprep.subr.bf16.mxu0 0
    %1108 = vmatpush1.bf16.msra.mxu0 0
    %1109 = vmatprep.subr.bf16.mxu0 0
    %1110 = vmatpush1.bf16.msra.mxu0 0
    %1111 = vmatprep.subr.bf16.mxu0 0
    %1112 = vmatpush1.bf16.msra.mxu0 0
    %1113 = vmatprep.subr.bf16.mxu0 0
    %1114 = vmatpush1.bf16.msra.mxu0 0
    %1115 = vmatprep.subr.bf16.mxu0 0
    %1116 = vmatpush1.bf16.msra.mxu0 0
    %1117 = vmatprep.subr.bf16.mxu0 0
    %1118 = vmatpush1.bf16.msra.mxu0 0
    %1119 = vmatprep.subr.bf16.mxu0 0
    %1120 = vmatpush1.bf16.msra.mxu0 0
    %1121 = vmatprep.mubr.bf16.mxu0 0
    %1122 = vmatmul.mubr.bf16.gmra.mrb[0].mxu0 %v1087
    %v1123 = vpop.f32.mrb[0].mxu0
    %v1124 = vadd.f32 0.0, %v1123
    %v1125 = vpop.f32.mrb[0].mxu0
    %v1126 = vpop.f32.mrb[0].mxu0
    %v1127 = vadd.f32 0.0, %v1126
    %v1128 = vpop.f32.mrb[0].mxu0
    %1129 = vdwg.mxu0
    %1132 = vrot.lane.b32.xlu0 %v1124, 16
    %v1133 = vpop.permute.xlu0 %1132
    %1134 = vrot.lane.b32.xlu0 %v1127, 16
    %v1135 = vpop.permute.xlu0 %1134
    %v1138 = vsel %vm289, %v999, %v1133
    %v1139 = vsel %vm289, %v1002, %v1135
    %v1140 = vpack.c.bf16 %v1139, %v1138
    %1141 = vrot.lane.b32.xlu0 %v832, 32
    %v1142 = vpop.permute.xlu0 %1141
    %1143 = vrot.lane.b32.xlu0 %v833, 32
    %v1144 = vpop.permute.xlu0 %1143
    %1148 = vrot.lane.b32.xlu0 %v823, 32
    %v1149 = vpop.permute.xlu0 %1148
    %v1152 = vsel %vm162, %v1140, 0
    %1154 = vmatprep.subr.bf16.mxu0 0
    %1155 = vmatpush1.bf16.msra.mxu0 %v1142
    %1156 = vmatprep.subr.bf16.mxu0 0
    %1157 = vmatpush1.bf16.msra.mxu0 %v1144
    %1158 = vmatprep.subr.bf16.mxu0 0
    %1159 = vmatpush1.bf16.msra.mxu0 0
    %1160 = vmatprep.subr.bf16.mxu0 0
    %1161 = vmatpush1.bf16.msra.mxu0 0
    %1162 = vmatprep.subr.bf16.mxu0 0
    %1163 = vmatpush1.bf16.msra.mxu0 0
    %1164 = vmatprep.subr.bf16.mxu0 0
    %1165 = vmatpush1.bf16.msra.mxu0 0
    %1166 = vmatprep.subr.bf16.mxu0 0
    %1167 = vmatpush1.bf16.msra.mxu0 0
    %1168 = vmatprep.subr.bf16.mxu0 0
    %1169 = vmatpush1.bf16.msra.mxu0 0
    %1170 = vmatprep.subr.bf16.mxu0 0
    %1171 = vmatpush1.bf16.msra.mxu0 0
    %1172 = vmatprep.subr.bf16.mxu0 0
    %1173 = vmatpush1.bf16.msra.mxu0 0
    %1174 = vmatprep.subr.bf16.mxu0 0
    %1175 = vmatpush1.bf16.msra.mxu0 0
    %1176 = vmatprep.subr.bf16.mxu0 0
    %1177 = vmatpush1.bf16.msra.mxu0 0
    %1178 = vmatprep.subr.bf16.mxu0 0
    %1179 = vmatpush1.bf16.msra.mxu0 0
    %1180 = vmatprep.subr.bf16.mxu0 0
    %1181 = vmatpush1.bf16.msra.mxu0 0
    %1182 = vmatprep.subr.bf16.mxu0 0
    %1183 = vmatpush1.bf16.msra.mxu0 0
    %1184 = vmatprep.subr.bf16.mxu0 0
    %1185 = vmatpush1.bf16.msra.mxu0 0
    %1186 = vmatprep.mubr.bf16.mxu0 0
    %1187 = vmatmul.mubr.bf16.gmra.mrb[0].mxu0 %v1152
    %v1188 = vpop.f32.mrb[0].mxu0
    %v1189 = vadd.f32 %v1149, %v1188
    %v1190 = vpop.f32.mrb[0].mxu0
    %v1191 = vpop.f32.mrb[0].mxu0
    %v1192 = vadd.f32 %v1149, %v1191
    %v1193 = vpop.f32.mrb[0].mxu0
    %1194 = vdwg.mxu0
    %v1195 = vadd.f32 %v1189, %v812
    %v1196 = vadd.f32 %v1192, %v813
    %v1197 = vsel %vm162, %v1195, 0.0
    %1198 = vadd.xlane.f32.xlu0 %v1197
    %v1199 = vpop.xlane.xlu0 %1198
    %v1200 = vsel %vm162, %v1196, 0.0
    %1201 = vadd.xlane.f32.xlu0 %v1200
    %v1202 = vpop.xlane.xlu0 %1201
    %v1203 = vmul.f32 %v1199, %v169
    %v1204 = vmul.f32 %v1202, %v169
    %v1205 = vsub.f32 %v1195, %v1203
    %v1206 = vsub.f32 %v1196, %v1204
    %v1207 = vmul.f32 %v1205, %v1205
    %v1208 = vmul.f32 %v1206, %v1206
    %v1209 = vsel %vm162, %v1207, 0.0
    %1210 = vadd.xlane.f32.xlu0 %v1209
    %v1211 = vpop.xlane.xlu0 %1210
    %v1212 = vsel %vm162, %v1208, 0.0
    %1213 = vadd.xlane.f32.xlu0 %v1212
    %v1214 = vpop.xlane.xlu0 %1213
    %v1215 = vmul.f32 %v1211, %v169
    %v1216 = vmul.f32 %v1214, %v169
    %v1217 = vadd.f32 %v1215, 1e-12
    %v1218 = vadd.f32 %v1216, 1e-12
    %v1219 = vrsqrt.pop %v1217
    %v1220 = vrsqrt.pop %v1218
    %v1221 = vmul.f32 %v1205, %v1219
    %v1222 = vmul.f32 %v1206, %v1220
    %v1223 = vlaneseq
    %v1224 = vshrl.u32 %v1223, 7
    %v1225 = vsub.s32 4, %v1224
    %v1226 = vrot.slane %v34, %v1225
    %v1227 = vmul.f32 %v1221, %v1226
    %v1228 = vmul.f32 %v1222, %v1226
    %1230 = vrot.lane.b32.xlu0 %v1226, 96
    %v1231 = vpop.permute.xlu0 %1230
    %v1233 = vadd.f32 %v1227, %v1231
    %v1234 = vadd.f32 %v1228, %v1231
    %v1235 = vpack.c.bf16 %v1234, %v1233
    %v1236 = vlaneseq
    %v1237 = vshrl.u32 %v1236, 7
    %v1238 = vsub.s32 5, %v1237
    %v1239 = vrot.slane %v34, %v1238
    %v1240 = vunpack.c.h.b16 %v815
    %v1241 = vunpack.c.h.b16 %v816
    %v1242 = vunpack.c.h.b16 %v817
    %v1243 = vunpack.c.h.b16 %v818
    %v1244 = vpack.c.b16 %v1241, %v1240
    %v1245 = vpack.c.b16 %v1243, %v1242
    %v1249 = vsel %vm162, %v1235, 0
    %1251 = vmatprep.subr.bf16.mxu0 0
    %1252 = vmatpush1.bf16.msra.mxu0 %v1244
    %1253 = vmatprep.subr.bf16.mxu0 0
    %1254 = vmatpush1.bf16.msra.mxu0 %v1245
    %1255 = vmatprep.subr.bf16.mxu0 0
    %1256 = vmatpush1.bf16.msra.mxu0 0
    %1257 = vmatprep.subr.bf16.mxu0 0
    %1258 = vmatpush1.bf16.msra.mxu0 0
    %1259 = vmatprep.subr.bf16.mxu0 0
    %1260 = vmatpush1.bf16.msra.mxu0 0
    %1261 = vmatprep.subr.bf16.mxu0 0
    %1262 = vmatpush1.bf16.msra.mxu0 0
    %1263 = vmatprep.subr.bf16.mxu0 0
    %1264 = vmatpush1.bf16.msra.mxu0 0
    %1265 = vmatprep.subr.bf16.mxu0 0
    %1266 = vmatpush1.bf16.msra.mxu0 0
    %1267 = vmatprep.subr.bf16.mxu0 0
    %1268 = vmatpush1.bf16.msra.mxu0 0
    %1269 = vmatprep.subr.bf16.mxu0 0
    %1270 = vmatpush1.bf16.msra.mxu0 0
    %1271 = vmatprep.subr.bf16.mxu0 0
    %1272 = vmatpush1.bf16.msra.mxu0 0
    %1273 = vmatprep.subr.bf16.mxu0 0
    %1274 = vmatpush1.bf16.msra.mxu0 0
    %1275 = vmatprep.subr.bf16.mxu0 0
    %1276 = vmatpush1.bf16.msra.mxu0 0
    %1277 = vmatprep.subr.bf16.mxu0 0
    %1278 = vmatpush1.bf16.msra.mxu0 0
    %1279 = vmatprep.subr.bf16.mxu0 0
    %1280 = vmatpush1.bf16.msra.mxu0 0
    %1281 = vmatprep.subr.bf16.mxu0 0
    %1282 = vmatpush1.bf16.msra.mxu0 0
    %1283 = vmatprep.mubr.bf16.mxu0 0
    %1284 = vmatmul.mubr.bf16.gmra.mrb[0].mxu0 %v1249
    %v1285 = vpop.f32.mrb[0].mxu0
    %v1286 = vadd.f32 %v1239, %v1285
    %v1287 = vpop.f32.mrb[0].mxu0
    %v1288 = vpop.f32.mrb[0].mxu0
    %v1289 = vadd.f32 %v1239, %v1288
    %v1290 = vpop.f32.mrb[0].mxu0
    %1291 = vdwg.mxu0
    %v1292 = vmul.f32 %v1286, 0.5
    %v1293 = vmul.f32 %v1289, 0.5
    %v1294 = vmul.f32 %v1286, 0.044715
    %v1295 = vmul.f32 %v1289, 0.044715
    %v1296 = vmul.f32 %v1294, %v1286
    %v1297 = vmul.f32 %v1295, %v1289
    %v1298 = vmul.f32 %v1296, %v1286
    %v1299 = vmul.f32 %v1297, %v1289
    %v1300 = vadd.f32 %v1286, %v1298
    %v1301 = vadd.f32 %v1289, %v1299
    %v1302 = vmul.f32 %v1300, 0.7978846
    %v1303 = vmul.f32 %v1301, 0.7978846
    %v1304 = vtanh.pop %v1302
    %v1305 = vtanh.pop %v1303
    %v1306 = vadd.f32 %v1304, 1.0
    %v1307 = vadd.f32 %v1305, 1.0
    %v1308 = vmul.f32 %v1292, %v1306
    %v1309 = vmul.f32 %v1293, %v1307
    %v1310 = vpack.c.bf16 %v1309, %v1308
    %1311 = vrot.lane.b32.xlu0 %v1244, 64
    %v1312 = vpop.permute.xlu0 %1311
    %1313 = vrot.lane.b32.xlu0 %v1245, 64
    %v1314 = vpop.permute.xlu0 %1313
    %1316 = vrot.lane.b32.xlu0 %v1239, 64
    %v1317 = vpop.permute.xlu0 %1316
    %v1320 = vsel %vm725, %v1310, 0
    %v1323 = vsel %vm725, %v1312, 0
    %v1326 = vsel %vm725, %v1314, 0
    %1328 = vmatprep.subr.bf16.mxu0 0
    %1329 = vmatpush1.bf16.xpose.msra.mxu0 %v1323
    %1330 = vmatprep.subr.bf16.mxu0 0
    %1331 = vmatpush1.bf16.xpose.msra.mxu0 %v1326
    %1332 = vmatprep.subr.bf16.mxu0 0
    %1333 = vmatpush1.bf16.xpose.msra.mxu0 0
    %1334 = vmatprep.subr.bf16.mxu0 0
    %1335 = vmatpush1.bf16.xpose.msra.mxu0 0
    %1336 = vmatprep.subr.bf16.mxu0 0
    %1337 = vmatpush1.bf16.xpose.msra.mxu0 0
    %1338 = vmatprep.subr.bf16.mxu0 0
    %1339 = vmatpush1.bf16.xpose.msra.mxu0 0
    %1340 = vmatprep.subr.bf16.mxu0 0
    %1341 = vmatpush1.bf16.xpose.msra.mxu0 0
    %1342 = vmatprep.subr.bf16.mxu0 0
    %1343 = vmatpush1.bf16.xpose.msra.mxu0 0
    %1344 = vmatprep.subr.bf16.mxu0 0
    %1345 = vmatpush1.bf16.xpose.msra.mxu0 0
    %1346 = vmatprep.subr.bf16.mxu0 0
    %1347 = vmatpush1.bf16.xpose.msra.mxu0 0
    %1348 = vmatprep.subr.bf16.mxu0 0
    %1349 = vmatpush1.bf16.xpose.msra.mxu0 0
    %1350 = vmatprep.subr.bf16.mxu0 0
    %1351 = vmatpush1.bf16.xpose.msra.mxu0 0
    %1352 = vmatprep.subr.bf16.mxu0 0
    %1353 = vmatpush1.bf16.xpose.msra.mxu0 0
    %1354 = vmatprep.subr.bf16.mxu0 0
    %1355 = vmatpush1.bf16.xpose.msra.mxu0 0
    %1356 = vmatprep.subr.bf16.mxu0 0
    %1357 = vmatpush1.bf16.xpose.msra.mxu0 0
    %1358 = vmatprep.subr.bf16.mxu0 0
    %1359 = vmatpush1.bf16.xpose.msra.mxu0 0
    %1360 = vmatprep.mubr.bf16.mxu0 0
    %1361 = vmatmul.mubr.bf16.gmra.mrb[0].mxu0 %v1320
    %v1362 = vpop.f32.mrb[0].mxu0
    %v1363 = vadd.f32 %v1317, %v1362
    %v1364 = vpop.f32.mrb[0].mxu0
    %v1365 = vpop.f32.mrb[0].mxu0
    %v1366 = vadd.f32 %v1317, %v1365
    %v1367 = vpop.f32.mrb[0].mxu0
    %1368 = vdwg.mxu0
    %v1369 = vadd.f32 %v1363, %v1233
    %v1370 = vadd.f32 %v1366, %v1234
    %v1371 = vsel %vm162, %v1369, 0.0
    %1372 = vadd.xlane.f32.xlu0 %v1371
    %v1373 = vpop.xlane.xlu0 %1372
    %v1374 = vsel %vm162, %v1370, 0.0
    %1375 = vadd.xlane.f32.xlu0 %v1374
    %v1376 = vpop.xlane.xlu0 %1375
    %v1377 = vmul.f32 %v1373, %v169
    %v1378 = vmul.f32 %v1376, %v169
    %v1379 = vsub.f32 %v1369, %v1377
    %v1380 = vsub.f32 %v1370, %v1378
    %v1381 = vmul.f32 %v1379, %v1379
    %v1382 = vmul.f32 %v1380, %v1380
    %v1383 = vsel %vm162, %v1381, 0.0
    %1384 = vadd.xlane.f32.xlu0 %v1383
    %v1385 = vpop.xlane.xlu0 %1384
    %v1386 = vsel %vm162, %v1382, 0.0
    %1387 = vadd.xlane.f32.xlu0 %v1386
    %v1388 = vpop.xlane.xlu0 %1387
    %v1389 = vmul.f32 %v1385, %v169
    %v1390 = vmul.f32 %v1388, %v169
    %v1391 = vadd.f32 %v1389, 1e-12
    %v1392 = vadd.f32 %v1390, 1e-12
    %v1393 = vrsqrt.pop %v1391
    %v1394 = vrsqrt.pop %v1392
    %v1395 = vmul.f32 %v1379, %v1393
    %v1396 = vmul.f32 %v1380, %v1394
    %1397 = vrot.lane.b32.xlu0 %v1226, 64
    %v1398 = vpop.permute.xlu0 %1397
    %v1400 = vmul.f32 %v1395, %v1398
    %v1401 = vmul.f32 %v1396, %v1398
    %1402 = vrot.lane.b32.xlu0 %v1226, 32
    %v1403 = vpop.permute.xlu0 %1402
    %v1405 = vadd.f32 %v1400, %v1403
    %v1406 = vadd.f32 %v1401, %v1403
    %s1407 = scalar_lea.vmem %s3, 64
    %v1408 = vld [vmem:[%s1407] sm:$0xff]
    %v1409 = vld [vmem:[%s1407 + $0x8] sm:$0xff]
    %v1410 = vld [vmem:[%s1407 + $0x10] sm:$0xff]
    %v1411 = vld [vmem:[%s1407 + $0x18] sm:$0xff]
    %v1413 = vrot.slane %v1406, 7
    %vm1415 = vcmask 1040384
    %v1416 = vsel %vm1415, %v1405, %v1413
    %v1417 = vpack.c.bf16 %v1416, %v1416
    %v1422 = vunpack.c.l.b16 %v1408
    %v1423 = vunpack.c.l.b16 %v1409
    %v1424 = vunpack.c.l.b16 %v1410
    %v1425 = vunpack.c.l.b16 %v1411
    %v1426 = vpack.c.b16 %v1423, %v1422
    %v1427 = vpack.c.b16 %v1425, %v1424
    %1430 = vrot.lane.b32.xlu0 %v193, 64
    %v1431 = vpop.permute.xlu0 %1430
    %v1434 = vsel %vm162, %v1417, 0
    %1436 = vmatprep.subr.bf16.mxu0 0
    %1437 = vmatpush1.bf16.msra.mxu0 %v1426
    %1438 = vmatprep.subr.bf16.mxu0 0
    %1439 = vmatpush1.bf16.msra.mxu0 %v1427
    %1440 = vmatprep.subr.bf16.mxu0 0
    %1441 = vmatpush1.bf16.msra.mxu0 0
    %1442 = vmatprep.subr.bf16.mxu0 0
    %1443 = vmatpush1.bf16.msra.mxu0 0
    %1444 = vmatprep.subr.bf16.mxu0 0
    %1445 = vmatpush1.bf16.msra.mxu0 0
    %1446 = vmatprep.subr.bf16.mxu0 0
    %1447 = vmatpush1.bf16.msra.mxu0 0
    %1448 = vmatprep.subr.bf16.mxu0 0
    %1449 = vmatpush1.bf16.msra.mxu0 0
    %1450 = vmatprep.subr.bf16.mxu0 0
    %1451 = vmatpush1.bf16.msra.mxu0 0
    %1452 = vmatprep.subr.bf16.mxu0 0
    %1453 = vmatpush1.bf16.msra.mxu0 0
    %1454 = vmatprep.subr.bf16.mxu0 0
    %1455 = vmatpush1.bf16.msra.mxu0 0
    %1456 = vmatprep.subr.bf16.mxu0 0
    %1457 = vmatpush1.bf16.msra.mxu0 0
    %1458 = vmatprep.subr.bf16.mxu0 0
    %1459 = vmatpush1.bf16.msra.mxu0 0
    %1460 = vmatprep.subr.bf16.mxu0 0
    %1461 = vmatpush1.bf16.msra.mxu0 0
    %1462 = vmatprep.subr.bf16.mxu0 0
    %1463 = vmatpush1.bf16.msra.mxu0 0
    %1464 = vmatprep.subr.bf16.mxu0 0
    %1465 = vmatpush1.bf16.msra.mxu0 0
    %1466 = vmatprep.subr.bf16.mxu0 0
    %1467 = vmatpush1.bf16.msra.mxu0 0
    %1468 = vmatprep.mubr.bf16.mxu0 0
    %1469 = vmatmul.mubr.bf16.gmra.mrb[0].mxu0 %v1434
    %v1470 = vpop.f32.mrb[0].mxu0
    %v1471 = vadd.f32 %v1431, %v1470
    %v1472 = vpop.f32.mrb[0].mxu0
    %v1473 = vpop.f32.mrb[0].mxu0
    %v1474 = vpop.f32.mrb[0].mxu0
    %1475 = vdwg.mxu0
    %v1476 = vtanh.pop %v1471
    %v1477 = vpack.c.bf16 %v1476, %v1476
    %v1478 = vlaneseq
    %v1479 = vshrl.u32 %v1478, 7
    %v1480 = vsub.s32 7, %v1479
    %v1481 = vrot.slane %v34, %v1480
    %v1482 = vunpack.c.h.b16 %v1408
    %v1483 = vunpack.c.h.b16 %v1409
    %v1484 = vunpack.c.h.b16 %v1410
    %v1485 = vunpack.c.h.b16 %v1411
    %v1486 = vpack.c.b16 %v1483, %v1482
    %v1487 = vpack.c.b16 %v1485, %v1484
    %1488 = vrot.lane.b32.xlu0 %v1426, 96
    %v1489 = vpop.permute.xlu0 %1488
    %1490 = vrot.lane.b32.xlu0 %v1486, 96
    %v1491 = vpop.permute.xlu0 %1490
    %1492 = vrot.lane.b32.xlu0 %v1427, 96
    %v1493 = vpop.permute.xlu0 %1492
    %1494 = vrot.lane.b32.xlu0 %v1487, 96
    %v1495 = vpop.permute.xlu0 %1494
    %vm1496 = vcmask 785408
    %v1497 = vsel %vm1496, %v1489, %v1491
    %v1498 = vsel %vm1496, %v1493, %v1495
    %v1502 = vsel %vm162, %v1477, 0
    %1504 = vmatprep.subr.bf16.mxu0 0
    %1505 = vmatpush1.bf16.msra.mxu0 %v1497
    %1506 = vmatprep.subr.bf16.mxu0 0
    %1507 = vmatpush1.bf16.msra.mxu0 %v1498
    %1508 = vmatprep.subr.bf16.mxu0 0
    %1509 = vmatpush1.bf16.msra.mxu0 0
    %1510 = vmatprep.subr.bf16.mxu0 0
    %1511 = vmatpush1.bf16.msra.mxu0 0
    %1512 = vmatprep.subr.bf16.mxu0 0
    %1513 = vmatpush1.bf16.msra.mxu0 0
    %1514 = vmatprep.subr.bf16.mxu0 0
    %1515 = vmatpush1.bf16.msra.mxu0 0
    %1516 = vmatprep.subr.bf16.mxu0 0
    %1517 = vmatpush1.bf16.msra.mxu0 0
    %1518 = vmatprep.subr.bf16.mxu0 0
    %1519 = vmatpush1.bf16.msra.mxu0 0
    %1520 = vmatprep.subr.bf16.mxu0 0
    %1521 = vmatpush1.bf16.msra.mxu0 0
    %1522 = vmatprep.subr.bf16.mxu0 0
    %1523 = vmatpush1.bf16.msra.mxu0 0
    %1524 = vmatprep.subr.bf16.mxu0 0
    %1525 = vmatpush1.bf16.msra.mxu0 0
    %1526 = vmatprep.subr.bf16.mxu0 0
    %1527 = vmatpush1.bf16.msra.mxu0 0
    %1528 = vmatprep.subr.bf16.mxu0 0
    %1529 = vmatpush1.bf16.msra.mxu0 0
    %1530 = vmatprep.subr.bf16.mxu0 0
    %1531 = vmatpush1.bf16.msra.mxu0 0
    %1532 = vmatprep.subr.bf16.mxu0 0
    %1533 = vmatpush1.bf16.msra.mxu0 0
    %1534 = vmatprep.subr.bf16.mxu0 0
    %1535 = vmatpush1.bf16.msra.mxu0 0
    %1536 = vmatprep.mubr.bf16.mxu0 0
    %1537 = vmatmul.mubr.bf16.gmra.mrb[0].mxu0 %v1502
    %v1538 = vpop.f32.mrb[0].mxu0
    %v1539 = vadd.f32 %v1481, %v1538
    %v1540 = vpop.f32.mrb[0].mxu0
    %v1541 = vpop.f32.mrb[0].mxu0
    %v1542 = vpop.f32.mrb[0].mxu0
    %1543 = vdwg.mxu0
    %1544 = vst [vmem:[#allocation5] sm:$0x3] %v1539
    // Predicated region
    $region26: #{tpu_custom_call.1} parent=1 // pred_check
      _
    $region27: #{tpu_custom_call.1} parent=1 // pred_check_branch
      %1546 = sbr.rel (0) target = $region29
    $region28: #{tpu_custom_call.1} parent=1 // pred_region
      %s1548 = ssub.s32 32, 32
      %1549 = vsyncadd [#allocation4], %s1548
      %s1551 = sshll.u32 [#allocation5], 4
      %s1552 = int_to_ptr.vmem [resolvable:$true] %s1551
      %1554 = dma.vmem_to_hbm [thread:$0]  %s1552, 32, %s5, [#allocation4]
    $region29: #{tpu_custom_call.1} parent=1 // pred_fallthru
      _
    // Predicated region
    $region30: #{tpu_custom_call.1} parent=1 // pred_check
      _
    $region31: #{tpu_custom_call.1} parent=1 // pred_check_branch
      %1556 = sbr.rel (0) target = $region33
    $region32: #{tpu_custom_call.1} parent=1 // pred_region
      %1557 = dma.done [#allocation4], 32
    $region33: #{tpu_custom_call.1} parent=1 // pred_fallthru
      _
    %1558 = vsyncpa [#allocation3], 1
    %1559 = vsyncpa [#allocation4], 1

</llo_original>
